<compile_context>
chip_gen: v5e
topology: v5e:2x2
jax: 0.10.0
libtpu: 0.0.40
codegen_flags: <defaults>
</compile_context>

<pallas_src>
import jax
import jax.numpy as jnp
from jax.experimental import pallas as pl
from jax.experimental.pallas import tpu as pltpu


def hybrid_kernel(gx_ref,    # (T, B, 4H) precomputed x-gates: x@W_ih + b_ih + b_hh, time-major
                  cnn_ref,   # (B, F)     cnn features
                  whh_ref,   # (H, 4H)    LSTM hidden->gates
                  wcnn_ref,  # (F, H)     fc_cnn weight
                  bcnn_ref,  # (1, H)     fc_cnn bias
                  w1_ref,    # (2H, H)    fc_combined[0] weight
                  b1_ref,    # (1, H)     fc_combined[0] bias
                  w2_ref,    # (H, C)     fc_combined[2] weight
                  b2_ref,    # (1, C)     fc_combined[2] bias
                  out_ref):  # (B, C)     logits
    T, B, _ = gx_ref.shape
    H = whh_ref.shape[0]

    # ---- Independent CNN branch first (off the recurrence tail) -----------
    cnn_out = (jnp.dot(cnn_ref[...], wcnn_ref[...],
                       preferred_element_type=jnp.float32)
               + bcnn_ref[...])                                        # (B, H)
    # concat([h_last, cnn_out]) @ W1 == h_last @ W1[:H] + cnn_out @ W1[H:]
    # The cnn half + bias is independent of the LSTM -> compute it now.
    cnn_part = (jnp.dot(cnn_out, w1_ref[H:2 * H, :],
                        preferred_element_type=jnp.float32)
                + b1_ref[...])                                         # (B, H)

    # ---- LSTM recurrence ---------------------------------------------------
    whh = whh_ref[...]                  # hoisted: read once, reused every step
    h = jnp.zeros((B, H), jnp.float32)
    c = jnp.zeros((B, H), jnp.float32)
    # T is static and tiny -> fully unrolled straight-line code; h/c stay in
    # vregs (no VMEM round-trips inside the serial dependence chain).
    for t in range(T):
        gates = gx_ref[t] + jnp.dot(h, whh,
                                    preferred_element_type=jnp.float32)  # (B, 4H)
        # H == 128 -> each slice below is a full, lane-aligned vreg.
        i_g = jax.nn.sigmoid(gates[:, 0 * H:1 * H])
        f_g = jax.nn.sigmoid(gates[:, 1 * H:2 * H])
        g_g = jnp.tanh(gates[:, 2 * H:3 * H])
        o_g = jax.nn.sigmoid(gates[:, 3 * H:4 * H])
        c = f_g * c + i_g * g_g
        h = o_g * jnp.tanh(c)

    # ---- MLP head ------------------------------------------------------------
    hid = jnp.maximum(
        jnp.dot(h, w1_ref[0:H, :], preferred_element_type=jnp.float32) + cnn_part,
        0.0)
    out_ref[...] = (jnp.dot(hid, w2_ref[...], preferred_element_type=jnp.float32)
                    + b2_ref[...])


def fold_input_projection(params):
    """Offline weight prep: fold the LSTM input projection and (b_ih + b_hh)
    into the embedding table so the per-token gate contribution is a gather.
    In a served model this would be computed once at load time."""
    return params["embedding"] @ params["w_ih"] + params["b_lstm"]      # (V, 4H)


def hybrid_forward(ocr_tokens, cnn_feats, params, emb_proj=None):
    """ocr_tokens: (B, T) int32; cnn_feats: (B, F) float32 -> (B, C) float32."""
    if emb_proj is None:
        emb_proj = fold_input_projection(params)                        # (V, 4H)
    # Gather from the folded table == embedding lookup + x @ W_ih + bias (glue).
    gx = jnp.take(emb_proj, ocr_tokens, axis=0)                         # (B, T, 4H)
    gx = jnp.transpose(gx, (1, 0, 2))                                   # (T, B, 4H) time-major

    B = ocr_tokens.shape[0]
    C = params["w2"].shape[1]

    args = (gx, cnn_feats,
            params["w_hh"],
            params["w_cnn"], params["b_cnn"],
            params["w1"], params["b1"], params["w2"], params["b2"])

    vmem = pl.BlockSpec(memory_space=pltpu.MemorySpace.VMEM)
    # Small, gridless call: the whole working set fits comfortably in VMEM.
    return pl.pallas_call(
        hybrid_kernel,
        out_shape=jax.ShapeDtypeStruct((B, C), jnp.float32),
        in_specs=[vmem] * len(args),
        out_specs=vmem,
    )(*args)


def reference_forward(ocr, cnn, params, H):
    """Pure-JAX reference of the original PyTorch forward (no folding)."""
    emb = jnp.take(params["embedding"], ocr, axis=0)                    # (B, T, E)
    B, T, _ = emb.shape
    h = jnp.zeros((B, H), jnp.float32)
    c = jnp.zeros((B, H), jnp.float32)
    for t in range(T):
        g = emb[:, t, :] @ params["w_ih"] + h @ params["w_hh"] + params["b_lstm"]
        i = jax.nn.sigmoid(g[:, :H])
        f = jax.nn.sigmoid(g[:, H:2 * H])
        gg = jnp.tanh(g[:, 2 * H:3 * H])
        o = jax.nn.sigmoid(g[:, 3 * H:])
        c = f * c + i * gg
        h = o * jnp.tanh(c)
    cnn_out = cnn @ params["w_cnn"] + params["b_cnn"]
    combined = jnp.concatenate([h, cnn_out], axis=1)
    hid = jnp.maximum(combined @ params["w1"] + params["b1"], 0.0)
    return hid @ params["w2"] + params["b2"]


if __name__ == "__main__":
    # Small, forward-consistent shapes. hidden_dim=128 matches the spec and is
    # lane-aligned; batch=8 fills the 8 f32 sublanes.
    B, T = 8, 8                # batch, OCR sequence length
    vocab_size = 500
    embedding_dim = 100
    hidden_dim = 128
    cnn_feature_dim = 64
    num_classes = 10

    key = jax.random.PRNGKey(0)
    ks = jax.random.split(key, 12)
    s = 0.1
    params = {
        "embedding": jax.random.normal(ks[0], (vocab_size, embedding_dim), jnp.float32) * s,
        "w_ih": jax.random.normal(ks[1], (embedding_dim, 4 * hidden_dim), jnp.float32) * s,
        "w_hh": jax.random.normal(ks[2], (hidden_dim, 4 * hidden_dim), jnp.float32) * s,
        "b_lstm": jax.random.normal(ks[3], (1, 4 * hidden_dim), jnp.float32) * s,  # b_ih + b_hh folded
        "w_cnn": jax.random.normal(ks[4], (cnn_feature_dim, hidden_dim), jnp.float32) * s,
        "b_cnn": jax.random.normal(ks[5], (1, hidden_dim), jnp.float32) * s,
        "w1": jax.random.normal(ks[6], (2 * hidden_dim, hidden_dim), jnp.float32) * s,
        "b1": jax.random.normal(ks[7], (1, hidden_dim), jnp.float32) * s,
        "w2": jax.random.normal(ks[8], (hidden_dim, num_classes), jnp.float32) * s,
        "b2": jax.random.normal(ks[9], (1, num_classes), jnp.float32) * s,
    }

    ocr = jax.random.randint(ks[10], (B, T), 0, vocab_size, dtype=jnp.int32)
    cnn = jax.random.normal(ks[11], (B, cnn_feature_dim), jnp.float32)

    out = jax.block_until_ready(hybrid_forward(ocr, cnn, params))
    assert out.shape == (B, num_classes)

    ref = reference_forward(ocr, cnn, params, hidden_dim)
    assert jnp.allclose(out, ref, atol=1e-4, rtol=1e-4), (out, ref)
    print("KERNEL_OK")
</pallas_src>

<mosaic_0001>
module attributes {stable_mosaic.version = 11 : i64} {
  func.func @hybrid_kernel(%arg0: memref<8x8x512xf32, #tpu.memory_space<vmem>>, %arg1: memref<8x64xf32, #tpu.memory_space<vmem>>, %arg2: memref<128x512xf32, #tpu.memory_space<vmem>>, %arg3: memref<64x128xf32, #tpu.memory_space<vmem>>, %arg4: memref<1x128xf32, #tpu.memory_space<vmem>>, %arg5: memref<256x128xf32, #tpu.memory_space<vmem>>, %arg6: memref<1x128xf32, #tpu.memory_space<vmem>>, %arg7: memref<128x10xf32, #tpu.memory_space<vmem>>, %arg8: memref<1x10xf32, #tpu.memory_space<vmem>>, %arg9: memref<8x10xf32, #tpu.memory_space<vmem>>) attributes {dimension_semantics = [], scalar_prefetch = 0 : i64, scratch_operands = 0 : i64, tpu.core_type = #tpu.core_type<tc>} {
    %c0 = arith.constant 0 : index
    %c0_0 = arith.constant 0 : index
    %0 = vector.load %arg1[%c0, %c0_0] : memref<8x64xf32, #tpu.memory_space<vmem>>, vector<8x64xf32>
    %c0_1 = arith.constant 0 : index
    %c0_2 = arith.constant 0 : index
    %1 = vector.load %arg3[%c0_1, %c0_2] : memref<64x128xf32, #tpu.memory_space<vmem>>, vector<64x128xf32>
    %cst = arith.constant dense<0.000000e+00> : vector<8x128xf32>
    %2 = tpu.matmul %0, %1, %cst {dimension_numbers = #tpu.dot_dimension_numbers<[1], [0], [0], [1], [0, 0, 1, 1], [], []>} : vector<8x64xf32>, vector<64x128xf32>, vector<8x128xf32> -> vector<8x128xf32>
    %c0_3 = arith.constant 0 : index
    %c0_4 = arith.constant 0 : index
    %3 = vector.load %arg4[%c0_3, %c0_4] : memref<1x128xf32, #tpu.memory_space<vmem>>, vector<1x128xf32>
    %4 = vector.broadcast %3 : vector<1x128xf32> to vector<8x128xf32>
    %5 = arith.addf %2, %4 : vector<8x128xf32>
    %c128 = arith.constant 128 : index
    %c0_5 = arith.constant 0 : index
    %6 = vector.load %arg5[%c128, %c0_5] : memref<256x128xf32, #tpu.memory_space<vmem>>, vector<128x128xf32>
    %cst_6 = arith.constant dense<0.000000e+00> : vector<8x128xf32>
    %7 = tpu.matmul %5, %6, %cst_6 {dimension_numbers = #tpu.dot_dimension_numbers<[1], [0], [0], [1], [0, 0, 1, 1], [], []>} : vector<8x128xf32>, vector<128x128xf32>, vector<8x128xf32> -> vector<8x128xf32>
    %c0_7 = arith.constant 0 : index
    %c0_8 = arith.constant 0 : index
    %8 = vector.load %arg6[%c0_7, %c0_8] : memref<1x128xf32, #tpu.memory_space<vmem>>, vector<1x128xf32>
    %9 = vector.broadcast %8 : vector<1x128xf32> to vector<8x128xf32>
    %10 = arith.addf %7, %9 : vector<8x128xf32>
    %c0_9 = arith.constant 0 : index
    %c0_10 = arith.constant 0 : index
    %11 = vector.load %arg2[%c0_9, %c0_10] : memref<128x512xf32, #tpu.memory_space<vmem>>, vector<128x512xf32>
    %cst_11 = arith.constant 0.000000e+00 : f32
    %12 = vector.broadcast %cst_11 : f32 to vector<8x128xf32>
    %cst_12 = arith.constant 0.000000e+00 : f32
    %13 = vector.broadcast %cst_12 : f32 to vector<8x128xf32>
    %c0_13 = arith.constant 0 : index
    %c0_14 = arith.constant 0 : index
    %c0_15 = arith.constant 0 : index
    %14 = vector.load %arg0[%c0_13, %c0_14, %c0_15] : memref<8x8x512xf32, #tpu.memory_space<vmem>>, vector<1x8x512xf32>
    %15 = vector.shape_cast %14 : vector<1x8x512xf32> to vector<8x512xf32>
    %cst_16 = arith.constant dense<0.000000e+00> : vector<8x512xf32>
    %16 = tpu.matmul %12, %11, %cst_16 {dimension_numbers = #tpu.dot_dimension_numbers<[1], [0], [0], [1], [0, 0, 1, 1], [], []>} : vector<8x128xf32>, vector<128x512xf32>, vector<8x512xf32> -> vector<8x512xf32>
    %17 = arith.addf %15, %16 : vector<8x512xf32>
    %18 = vector.extract_strided_slice %17 {offsets = [0, 0], sizes = [8, 128], strides = [1, 1]} : vector<8x512xf32> to vector<8x128xf32>
    %19 = arith.negf %18 : vector<8x128xf32>
    %20 = math.exp %19 : vector<8x128xf32>
    %cst_17 = arith.constant 1.000000e+00 : f32
    %21 = vector.broadcast %cst_17 : f32 to vector<8x128xf32>
    %22 = arith.addf %21, %20 : vector<8x128xf32>
    %23 = arith.divf %21, %22 : vector<8x128xf32>
    %24 = vector.extract_strided_slice %17 {offsets = [0, 128], sizes = [8, 128], strides = [1, 1]} : vector<8x512xf32> to vector<8x128xf32>
    %25 = arith.negf %24 : vector<8x128xf32>
    %26 = math.exp %25 : vector<8x128xf32>
    %cst_18 = arith.constant 1.000000e+00 : f32
    %27 = vector.broadcast %cst_18 : f32 to vector<8x128xf32>
    %28 = arith.addf %27, %26 : vector<8x128xf32>
    %29 = arith.divf %27, %28 : vector<8x128xf32>
    %30 = vector.extract_strided_slice %17 {offsets = [0, 256], sizes = [8, 128], strides = [1, 1]} : vector<8x512xf32> to vector<8x128xf32>
    %31 = math.tanh %30 : vector<8x128xf32>
    %32 = vector.extract_strided_slice %17 {offsets = [0, 384], sizes = [8, 128], strides = [1, 1]} : vector<8x512xf32> to vector<8x128xf32>
    %33 = arith.negf %32 : vector<8x128xf32>
    %34 = math.exp %33 : vector<8x128xf32>
    %cst_19 = arith.constant 1.000000e+00 : f32
    %35 = vector.broadcast %cst_19 : f32 to vector<8x128xf32>
    %36 = arith.addf %35, %34 : vector<8x128xf32>
    %37 = arith.divf %35, %36 : vector<8x128xf32>
    %38 = arith.mulf %29, %13 : vector<8x128xf32>
    %39 = arith.mulf %23, %31 : vector<8x128xf32>
    %40 = arith.addf %38, %39 : vector<8x128xf32>
    %41 = math.tanh %40 : vector<8x128xf32>
    %42 = arith.mulf %37, %41 : vector<8x128xf32>
    %c1 = arith.constant 1 : index
    %c0_20 = arith.constant 0 : index
    %c0_21 = arith.constant 0 : index
    %43 = vector.load %arg0[%c1, %c0_20, %c0_21] : memref<8x8x512xf32, #tpu.memory_space<vmem>>, vector<1x8x512xf32>
    %44 = vector.shape_cast %43 : vector<1x8x512xf32> to vector<8x512xf32>
    %cst_22 = arith.constant dense<0.000000e+00> : vector<8x512xf32>
    %45 = tpu.matmul %42, %11, %cst_22 {dimension_numbers = #tpu.dot_dimension_numbers<[1], [0], [0], [1], [0, 0, 1, 1], [], []>} : vector<8x128xf32>, vector<128x512xf32>, vector<8x512xf32> -> vector<8x512xf32>
    %46 = arith.addf %44, %45 : vector<8x512xf32>
    %47 = vector.extract_strided_slice %46 {offsets = [0, 0], sizes = [8, 128], strides = [1, 1]} : vector<8x512xf32> to vector<8x128xf32>
    %48 = arith.negf %47 : vector<8x128xf32>
    %49 = math.exp %48 : vector<8x128xf32>
    %cst_23 = arith.constant 1.000000e+00 : f32
    %50 = vector.broadcast %cst_23 : f32 to vector<8x128xf32>
    %51 = arith.addf %50, %49 : vector<8x128xf32>
    %52 = arith.divf %50, %51 : vector<8x128xf32>
    %53 = vector.extract_strided_slice %46 {offsets = [0, 128], sizes = [8, 128], strides = [1, 1]} : vector<8x512xf32> to vector<8x128xf32>
    %54 = arith.negf %53 : vector<8x128xf32>
    %55 = math.exp %54 : vector<8x128xf32>
    %cst_24 = arith.constant 1.000000e+00 : f32
    %56 = vector.broadcast %cst_24 : f32 to vector<8x128xf32>
    %57 = arith.addf %56, %55 : vector<8x128xf32>
    %58 = arith.divf %56, %57 : vector<8x128xf32>
    %59 = vector.extract_strided_slice %46 {offsets = [0, 256], sizes = [8, 128], strides = [1, 1]} : vector<8x512xf32> to vector<8x128xf32>
    %60 = math.tanh %59 : vector<8x128xf32>
    %61 = vector.extract_strided_slice %46 {offsets = [0, 384], sizes = [8, 128], strides = [1, 1]} : vector<8x512xf32> to vector<8x128xf32>
    %62 = arith.negf %61 : vector<8x128xf32>
    %63 = math.exp %62 : vector<8x128xf32>
    %cst_25 = arith.constant 1.000000e+00 : f32
    %64 = vector.broadcast %cst_25 : f32 to vector<8x128xf32>
    %65 = arith.addf %64, %63 : vector<8x128xf32>
    %66 = arith.divf %64, %65 : vector<8x128xf32>
    %67 = arith.mulf %58, %40 : vector<8x128xf32>
    %68 = arith.mulf %52, %60 : vector<8x128xf32>
    %69 = arith.addf %67, %68 : vector<8x128xf32>
    %70 = math.tanh %69 : vector<8x128xf32>
    %71 = arith.mulf %66, %70 : vector<8x128xf32>
    %c2 = arith.constant 2 : index
    %c0_26 = arith.constant 0 : index
    %c0_27 = arith.constant 0 : index
    %72 = vector.load %arg0[%c2, %c0_26, %c0_27] : memref<8x8x512xf32, #tpu.memory_space<vmem>>, vector<1x8x512xf32>
    %73 = vector.shape_cast %72 : vector<1x8x512xf32> to vector<8x512xf32>
    %cst_28 = arith.constant dense<0.000000e+00> : vector<8x512xf32>
    %74 = tpu.matmul %71, %11, %cst_28 {dimension_numbers = #tpu.dot_dimension_numbers<[1], [0], [0], [1], [0, 0, 1, 1], [], []>} : vector<8x128xf32>, vector<128x512xf32>, vector<8x512xf32> -> vector<8x512xf32>
    %75 = arith.addf %73, %74 : vector<8x512xf32>
    %76 = vector.extract_strided_slice %75 {offsets = [0, 0], sizes = [8, 128], strides = [1, 1]} : vector<8x512xf32> to vector<8x128xf32>
    %77 = arith.negf %76 : vector<8x128xf32>
    %78 = math.exp %77 : vector<8x128xf32>
    %cst_29 = arith.constant 1.000000e+00 : f32
    %79 = vector.broadcast %cst_29 : f32 to vector<8x128xf32>
    %80 = arith.addf %79, %78 : vector<8x128xf32>
    %81 = arith.divf %79, %80 : vector<8x128xf32>
    %82 = vector.extract_strided_slice %75 {offsets = [0, 128], sizes = [8, 128], strides = [1, 1]} : vector<8x512xf32> to vector<8x128xf32>
    %83 = arith.negf %82 : vector<8x128xf32>
    %84 = math.exp %83 : vector<8x128xf32>
    %cst_30 = arith.constant 1.000000e+00 : f32
    %85 = vector.broadcast %cst_30 : f32 to vector<8x128xf32>
    %86 = arith.addf %85, %84 : vector<8x128xf32>
    %87 = arith.divf %85, %86 : vector<8x128xf32>
    %88 = vector.extract_strided_slice %75 {offsets = [0, 256], sizes = [8, 128], strides = [1, 1]} : vector<8x512xf32> to vector<8x128xf32>
    %89 = math.tanh %88 : vector<8x128xf32>
    %90 = vector.extract_strided_slice %75 {offsets = [0, 384], sizes = [8, 128], strides = [1, 1]} : vector<8x512xf32> to vector<8x128xf32>
    %91 = arith.negf %90 : vector<8x128xf32>
    %92 = math.exp %91 : vector<8x128xf32>
    %cst_31 = arith.constant 1.000000e+00 : f32
    %93 = vector.broadcast %cst_31 : f32 to vector<8x128xf32>
    %94 = arith.addf %93, %92 : vector<8x128xf32>
    %95 = arith.divf %93, %94 : vector<8x128xf32>
    %96 = arith.mulf %87, %69 : vector<8x128xf32>
    %97 = arith.mulf %81, %89 : vector<8x128xf32>
    %98 = arith.addf %96, %97 : vector<8x128xf32>
    %99 = math.tanh %98 : vector<8x128xf32>
    %100 = arith.mulf %95, %99 : vector<8x128xf32>
    %c3 = arith.constant 3 : index
    %c0_32 = arith.constant 0 : index
    %c0_33 = arith.constant 0 : index
    %101 = vector.load %arg0[%c3, %c0_32, %c0_33] : memref<8x8x512xf32, #tpu.memory_space<vmem>>, vector<1x8x512xf32>
    %102 = vector.shape_cast %101 : vector<1x8x512xf32> to vector<8x512xf32>
    %cst_34 = arith.constant dense<0.000000e+00> : vector<8x512xf32>
    %103 = tpu.matmul %100, %11, %cst_34 {dimension_numbers = #tpu.dot_dimension_numbers<[1], [0], [0], [1], [0, 0, 1, 1], [], []>} : vector<8x128xf32>, vector<128x512xf32>, vector<8x512xf32> -> vector<8x512xf32>
    %104 = arith.addf %102, %103 : vector<8x512xf32>
    %105 = vector.extract_strided_slice %104 {offsets = [0, 0], sizes = [8, 128], strides = [1, 1]} : vector<8x512xf32> to vector<8x128xf32>
    %106 = arith.negf %105 : vector<8x128xf32>
    %107 = math.exp %106 : vector<8x128xf32>
    %cst_35 = arith.constant 1.000000e+00 : f32
    %108 = vector.broadcast %cst_35 : f32 to vector<8x128xf32>
    %109 = arith.addf %108, %107 : vector<8x128xf32>
    %110 = arith.divf %108, %109 : vector<8x128xf32>
    %111 = vector.extract_strided_slice %104 {offsets = [0, 128], sizes = [8, 128], strides = [1, 1]} : vector<8x512xf32> to vector<8x128xf32>
    %112 = arith.negf %111 : vector<8x128xf32>
    %113 = math.exp %112 : vector<8x128xf32>
    %cst_36 = arith.constant 1.000000e+00 : f32
    %114 = vector.broadcast %cst_36 : f32 to vector<8x128xf32>
    %115 = arith.addf %114, %113 : vector<8x128xf32>
    %116 = arith.divf %114, %115 : vector<8x128xf32>
    %117 = vector.extract_strided_slice %104 {offsets = [0, 256], sizes = [8, 128], strides = [1, 1]} : vector<8x512xf32> to vector<8x128xf32>
    %118 = math.tanh %117 : vector<8x128xf32>
    %119 = vector.extract_strided_slice %104 {offsets = [0, 384], sizes = [8, 128], strides = [1, 1]} : vector<8x512xf32> to vector<8x128xf32>
    %120 = arith.negf %119 : vector<8x128xf32>
    %121 = math.exp %120 : vector<8x128xf32>
    %cst_37 = arith.constant 1.000000e+00 : f32
    %122 = vector.broadcast %cst_37 : f32 to vector<8x128xf32>
    %123 = arith.addf %122, %121 : vector<8x128xf32>
    %124 = arith.divf %122, %123 : vector<8x128xf32>
    %125 = arith.mulf %116, %98 : vector<8x128xf32>
    %126 = arith.mulf %110, %118 : vector<8x128xf32>
    %127 = arith.addf %125, %126 : vector<8x128xf32>
    %128 = math.tanh %127 : vector<8x128xf32>
    %129 = arith.mulf %124, %128 : vector<8x128xf32>
    %c4 = arith.constant 4 : index
    %c0_38 = arith.constant 0 : index
    %c0_39 = arith.constant 0 : index
    %130 = vector.load %arg0[%c4, %c0_38, %c0_39] : memref<8x8x512xf32, #tpu.memory_space<vmem>>, vector<1x8x512xf32>
    %131 = vector.shape_cast %130 : vector<1x8x512xf32> to vector<8x512xf32>
    %cst_40 = arith.constant dense<0.000000e+00> : vector<8x512xf32>
    %132 = tpu.matmul %129, %11, %cst_40 {dimension_numbers = #tpu.dot_dimension_numbers<[1], [0], [0], [1], [0, 0, 1, 1], [], []>} : vector<8x128xf32>, vector<128x512xf32>, vector<8x512xf32> -> vector<8x512xf32>
    %133 = arith.addf %131, %132 : vector<8x512xf32>
    %134 = vector.extract_strided_slice %133 {offsets = [0, 0], sizes = [8, 128], strides = [1, 1]} : vector<8x512xf32> to vector<8x128xf32>
    %135 = arith.negf %134 : vector<8x128xf32>
    %136 = math.exp %135 : vector<8x128xf32>
    %cst_41 = arith.constant 1.000000e+00 : f32
    %137 = vector.broadcast %cst_41 : f32 to vector<8x128xf32>
    %138 = arith.addf %137, %136 : vector<8x128xf32>
    %139 = arith.divf %137, %138 : vector<8x128xf32>
    %140 = vector.extract_strided_slice %133 {offsets = [0, 128], sizes = [8, 128], strides = [1, 1]} : vector<8x512xf32> to vector<8x128xf32>
    %141 = arith.negf %140 : vector<8x128xf32>
    %142 = math.exp %141 : vector<8x128xf32>
    %cst_42 = arith.constant 1.000000e+00 : f32
    %143 = vector.broadcast %cst_42 : f32 to vector<8x128xf32>
    %144 = arith.addf %143, %142 : vector<8x128xf32>
    %145 = arith.divf %143, %144 : vector<8x128xf32>
    %146 = vector.extract_strided_slice %133 {offsets = [0, 256], sizes = [8, 128], strides = [1, 1]} : vector<8x512xf32> to vector<8x128xf32>
    %147 = math.tanh %146 : vector<8x128xf32>
    %148 = vector.extract_strided_slice %133 {offsets = [0, 384], sizes = [8, 128], strides = [1, 1]} : vector<8x512xf32> to vector<8x128xf32>
    %149 = arith.negf %148 : vector<8x128xf32>
    %150 = math.exp %149 : vector<8x128xf32>
    %cst_43 = arith.constant 1.000000e+00 : f32
    %151 = vector.broadcast %cst_43 : f32 to vector<8x128xf32>
    %152 = arith.addf %151, %150 : vector<8x128xf32>
    %153 = arith.divf %151, %152 : vector<8x128xf32>
    %154 = arith.mulf %145, %127 : vector<8x128xf32>
    %155 = arith.mulf %139, %147 : vector<8x128xf32>
    %156 = arith.addf %154, %155 : vector<8x128xf32>
    %157 = math.tanh %156 : vector<8x128xf32>
    %158 = arith.mulf %153, %157 : vector<8x128xf32>
    %c5 = arith.constant 5 : index
    %c0_44 = arith.constant 0 : index
    %c0_45 = arith.constant 0 : index
    %159 = vector.load %arg0[%c5, %c0_44, %c0_45] : memref<8x8x512xf32, #tpu.memory_space<vmem>>, vector<1x8x512xf32>
    %160 = vector.shape_cast %159 : vector<1x8x512xf32> to vector<8x512xf32>
    %cst_46 = arith.constant dense<0.000000e+00> : vector<8x512xf32>
    %161 = tpu.matmul %158, %11, %cst_46 {dimension_numbers = #tpu.dot_dimension_numbers<[1], [0], [0], [1], [0, 0, 1, 1], [], []>} : vector<8x128xf32>, vector<128x512xf32>, vector<8x512xf32> -> vector<8x512xf32>
    %162 = arith.addf %160, %161 : vector<8x512xf32>
    %163 = vector.extract_strided_slice %162 {offsets = [0, 0], sizes = [8, 128], strides = [1, 1]} : vector<8x512xf32> to vector<8x128xf32>
    %164 = arith.negf %163 : vector<8x128xf32>
    %165 = math.exp %164 : vector<8x128xf32>
    %cst_47 = arith.constant 1.000000e+00 : f32
    %166 = vector.broadcast %cst_47 : f32 to vector<8x128xf32>
    %167 = arith.addf %166, %165 : vector<8x128xf32>
    %168 = arith.divf %166, %167 : vector<8x128xf32>
    %169 = vector.extract_strided_slice %162 {offsets = [0, 128], sizes = [8, 128], strides = [1, 1]} : vector<8x512xf32> to vector<8x128xf32>
    %170 = arith.negf %169 : vector<8x128xf32>
    %171 = math.exp %170 : vector<8x128xf32>
    %cst_48 = arith.constant 1.000000e+00 : f32
    %172 = vector.broadcast %cst_48 : f32 to vector<8x128xf32>
    %173 = arith.addf %172, %171 : vector<8x128xf32>
    %174 = arith.divf %172, %173 : vector<8x128xf32>
    %175 = vector.extract_strided_slice %162 {offsets = [0, 256], sizes = [8, 128], strides = [1, 1]} : vector<8x512xf32> to vector<8x128xf32>
    %176 = math.tanh %175 : vector<8x128xf32>
    %177 = vector.extract_strided_slice %162 {offsets = [0, 384], sizes = [8, 128], strides = [1, 1]} : vector<8x512xf32> to vector<8x128xf32>
    %178 = arith.negf %177 : vector<8x128xf32>
    %179 = math.exp %178 : vector<8x128xf32>
    %cst_49 = arith.constant 1.000000e+00 : f32
    %180 = vector.broadcast %cst_49 : f32 to vector<8x128xf32>
    %181 = arith.addf %180, %179 : vector<8x128xf32>
    %182 = arith.divf %180, %181 : vector<8x128xf32>
    %183 = arith.mulf %174, %156 : vector<8x128xf32>
    %184 = arith.mulf %168, %176 : vector<8x128xf32>
    %185 = arith.addf %183, %184 : vector<8x128xf32>
    %186 = math.tanh %185 : vector<8x128xf32>
    %187 = arith.mulf %182, %186 : vector<8x128xf32>
    %c6 = arith.constant 6 : index
    %c0_50 = arith.constant 0 : index
    %c0_51 = arith.constant 0 : index
    %188 = vector.load %arg0[%c6, %c0_50, %c0_51] : memref<8x8x512xf32, #tpu.memory_space<vmem>>, vector<1x8x512xf32>
    %189 = vector.shape_cast %188 : vector<1x8x512xf32> to vector<8x512xf32>
    %cst_52 = arith.constant dense<0.000000e+00> : vector<8x512xf32>
    %190 = tpu.matmul %187, %11, %cst_52 {dimension_numbers = #tpu.dot_dimension_numbers<[1], [0], [0], [1], [0, 0, 1, 1], [], []>} : vector<8x128xf32>, vector<128x512xf32>, vector<8x512xf32> -> vector<8x512xf32>
    %191 = arith.addf %189, %190 : vector<8x512xf32>
    %192 = vector.extract_strided_slice %191 {offsets = [0, 0], sizes = [8, 128], strides = [1, 1]} : vector<8x512xf32> to vector<8x128xf32>
    %193 = arith.negf %192 : vector<8x128xf32>
    %194 = math.exp %193 : vector<8x128xf32>
    %cst_53 = arith.constant 1.000000e+00 : f32
    %195 = vector.broadcast %cst_53 : f32 to vector<8x128xf32>
    %196 = arith.addf %195, %194 : vector<8x128xf32>
    %197 = arith.divf %195, %196 : vector<8x128xf32>
    %198 = vector.extract_strided_slice %191 {offsets = [0, 128], sizes = [8, 128], strides = [1, 1]} : vector<8x512xf32> to vector<8x128xf32>
    %199 = arith.negf %198 : vector<8x128xf32>
    %200 = math.exp %199 : vector<8x128xf32>
    %cst_54 = arith.constant 1.000000e+00 : f32
    %201 = vector.broadcast %cst_54 : f32 to vector<8x128xf32>
    %202 = arith.addf %201, %200 : vector<8x128xf32>
    %203 = arith.divf %201, %202 : vector<8x128xf32>
    %204 = vector.extract_strided_slice %191 {offsets = [0, 256], sizes = [8, 128], strides = [1, 1]} : vector<8x512xf32> to vector<8x128xf32>
    %205 = math.tanh %204 : vector<8x128xf32>
    %206 = vector.extract_strided_slice %191 {offsets = [0, 384], sizes = [8, 128], strides = [1, 1]} : vector<8x512xf32> to vector<8x128xf32>
    %207 = arith.negf %206 : vector<8x128xf32>
    %208 = math.exp %207 : vector<8x128xf32>
    %cst_55 = arith.constant 1.000000e+00 : f32
    %209 = vector.broadcast %cst_55 : f32 to vector<8x128xf32>
    %210 = arith.addf %209, %208 : vector<8x128xf32>
    %211 = arith.divf %209, %210 : vector<8x128xf32>
    %212 = arith.mulf %203, %185 : vector<8x128xf32>
    %213 = arith.mulf %197, %205 : vector<8x128xf32>
    %214 = arith.addf %212, %213 : vector<8x128xf32>
    %215 = math.tanh %214 : vector<8x128xf32>
    %216 = arith.mulf %211, %215 : vector<8x128xf32>
    %c7 = arith.constant 7 : index
    %c0_56 = arith.constant 0 : index
    %c0_57 = arith.constant 0 : index
    %217 = vector.load %arg0[%c7, %c0_56, %c0_57] : memref<8x8x512xf32, #tpu.memory_space<vmem>>, vector<1x8x512xf32>
    %218 = vector.shape_cast %217 : vector<1x8x512xf32> to vector<8x512xf32>
    %cst_58 = arith.constant dense<0.000000e+00> : vector<8x512xf32>
    %219 = tpu.matmul %216, %11, %cst_58 {dimension_numbers = #tpu.dot_dimension_numbers<[1], [0], [0], [1], [0, 0, 1, 1], [], []>} : vector<8x128xf32>, vector<128x512xf32>, vector<8x512xf32> -> vector<8x512xf32>
    %220 = arith.addf %218, %219 : vector<8x512xf32>
    %221 = vector.extract_strided_slice %220 {offsets = [0, 0], sizes = [8, 128], strides = [1, 1]} : vector<8x512xf32> to vector<8x128xf32>
    %222 = arith.negf %221 : vector<8x128xf32>
    %223 = math.exp %222 : vector<8x128xf32>
    %cst_59 = arith.constant 1.000000e+00 : f32
    %224 = vector.broadcast %cst_59 : f32 to vector<8x128xf32>
    %225 = arith.addf %224, %223 : vector<8x128xf32>
    %226 = arith.divf %224, %225 : vector<8x128xf32>
    %227 = vector.extract_strided_slice %220 {offsets = [0, 128], sizes = [8, 128], strides = [1, 1]} : vector<8x512xf32> to vector<8x128xf32>
    %228 = arith.negf %227 : vector<8x128xf32>
    %229 = math.exp %228 : vector<8x128xf32>
    %cst_60 = arith.constant 1.000000e+00 : f32
    %230 = vector.broadcast %cst_60 : f32 to vector<8x128xf32>
    %231 = arith.addf %230, %229 : vector<8x128xf32>
    %232 = arith.divf %230, %231 : vector<8x128xf32>
    %233 = vector.extract_strided_slice %220 {offsets = [0, 256], sizes = [8, 128], strides = [1, 1]} : vector<8x512xf32> to vector<8x128xf32>
    %234 = math.tanh %233 : vector<8x128xf32>
    %235 = vector.extract_strided_slice %220 {offsets = [0, 384], sizes = [8, 128], strides = [1, 1]} : vector<8x512xf32> to vector<8x128xf32>
    %236 = arith.negf %235 : vector<8x128xf32>
    %237 = math.exp %236 : vector<8x128xf32>
    %cst_61 = arith.constant 1.000000e+00 : f32
    %238 = vector.broadcast %cst_61 : f32 to vector<8x128xf32>
    %239 = arith.addf %238, %237 : vector<8x128xf32>
    %240 = arith.divf %238, %239 : vector<8x128xf32>
    %241 = arith.mulf %232, %214 : vector<8x128xf32>
    %242 = arith.mulf %226, %234 : vector<8x128xf32>
    %243 = arith.addf %241, %242 : vector<8x128xf32>
    %244 = math.tanh %243 : vector<8x128xf32>
    %245 = arith.mulf %240, %244 : vector<8x128xf32>
    %c0_62 = arith.constant 0 : index
    %c0_63 = arith.constant 0 : index
    %246 = vector.load %arg5[%c0_62, %c0_63] : memref<256x128xf32, #tpu.memory_space<vmem>>, vector<128x128xf32>
    %cst_64 = arith.constant dense<0.000000e+00> : vector<8x128xf32>
    %247 = tpu.matmul %245, %246, %cst_64 {dimension_numbers = #tpu.dot_dimension_numbers<[1], [0], [0], [1], [0, 0, 1, 1], [], []>} : vector<8x128xf32>, vector<128x128xf32>, vector<8x128xf32> -> vector<8x128xf32>
    %248 = arith.addf %247, %10 : vector<8x128xf32>
    %cst_65 = arith.constant 0.000000e+00 : f32
    %249 = vector.broadcast %cst_65 : f32 to vector<8x128xf32>
    %250 = arith.maximumf %248, %249 : vector<8x128xf32>
    %c0_66 = arith.constant 0 : index
    %c0_67 = arith.constant 0 : index
    %251 = vector.load %arg7[%c0_66, %c0_67] : memref<128x10xf32, #tpu.memory_space<vmem>>, vector<128x10xf32>
    %cst_68 = arith.constant dense<0.000000e+00> : vector<8x10xf32>
    %252 = tpu.matmul %250, %251, %cst_68 {dimension_numbers = #tpu.dot_dimension_numbers<[1], [0], [0], [1], [0, 0, 1, 1], [], []>} : vector<8x128xf32>, vector<128x10xf32>, vector<8x10xf32> -> vector<8x10xf32>
    %c0_69 = arith.constant 0 : index
    %c0_70 = arith.constant 0 : index
    %253 = vector.load %arg8[%c0_69, %c0_70] : memref<1x10xf32, #tpu.memory_space<vmem>>, vector<1x10xf32>
    %254 = vector.broadcast %253 : vector<1x10xf32> to vector<8x10xf32>
    %255 = arith.addf %252, %254 : vector<8x10xf32>
    %c0_71 = arith.constant 0 : index
    %c0_72 = arith.constant 0 : index
    %256 = vector.load %arg9[%c0_71, %c0_72] : memref<8x10xf32, #tpu.memory_space<vmem>>, vector<8x10xf32>
    tpu.vector_store %arg9[%c0_71, %c0_72], %255 {strides = array<i32>} : memref<8x10xf32, #tpu.memory_space<vmem>>, vector<8x10xf32>,
    return
  }
}

</mosaic_0001>

<llo_original>
// kernel: tpu_custom_call.1
$region0: #{tpu_custom_call.1}
  #allocation0 [shape = 'u32[]', space=smem, size = 0x4, offset = 0x4, fixed_abs, tag = 'smem constant byte address 0x4 - core index']
  #allocation1 [shape = 'u32[72,128]{1,0:T(1,128)}', space=vmem, size = 0x9000, scoped, tag = 'internal scratch']
  %s0 = inlined_call_operand.hbm [shape: f32[8,8,512], index: 0, kind: input, shape index: {}]
  %s1 = inlined_call_operand.vmem [shape: f32[8,64], index: 1, kind: input, shape index: {}]
  %s2 = inlined_call_operand.hbm [shape: f32[128,512], index: 2, kind: input, shape index: {}]
  %s3 = inlined_call_operand.vmem [shape: f32[64,128], index: 3, kind: input, shape index: {}]
  %s4 = inlined_call_operand.vmem [shape: f32[1,128], index: 4, kind: input, shape index: {}]
  %s5 = inlined_call_operand.hbm [shape: f32[256,128], index: 5, kind: input, shape index: {}]
  %s6 = inlined_call_operand.vmem [shape: f32[1,128], index: 6, kind: input, shape index: {}]
  %s7 = inlined_call_operand.vmem [shape: f32[128,10], index: 7, kind: input, shape index: {}]
  %s8 = inlined_call_operand.vmem [shape: f32[1,10], index: 8, kind: input, shape index: {}]
  %s9 = inlined_call_operand.hbm [shape: f32[8,10], index: 9, kind: output, shape index: {}]
  %s10 = sld [smem:[#allocation0]]
  $region58: #{tpu_custom_call.1} parent=0
    _
  %s12 = ssub.s32 1, %s10
  %s13 = scalar_select 0, %s12, %s10
  $region1: #{tpu_custom_call.1} parent=0
    #allocation2 [shape = 'u8[131072]{0}', space=vmem, size = 0x20000, scoped, tag = 'input window, operand 0, single buffered']
    #allocation3 [shape = 's32[1]{0}', space=sflag, size = 0x4, scoped, tag = 'scoped memory for tpu_custom_call.1']
    #allocation4 [shape = 's32[1]{0}', space=sflag, size = 0x4, scoped, tag = 'scoped memory for tpu_custom_call.1']
    #allocation5 [shape = 'u8[262144]{0}', space=vmem, size = 0x40000, scoped, tag = 'input window, operand 2, single buffered']
    #allocation6 [shape = 's32[1]{0}', space=sflag, size = 0x4, scoped, tag = 'scoped memory for tpu_custom_call.1']
    #allocation7 [shape = 'u8[131072]{0}', space=vmem, size = 0x20000, scoped, tag = 'input window, operand 5, single buffered']
    #allocation8 [shape = 'u8[4096]{0}', space=vmem, size = 0x1000, scoped, tag = 'output window, operand 0, single buffered']
    %14 = vsyncpa [#allocation3], 0
    %15 = vsyncpa [#allocation6], 0
    %16 = vsyncpa [#allocation4], 0
    // Predicated region
    $region2: #{tpu_custom_call.1} parent=1 // pred_check
      _
    $region3: #{tpu_custom_call.1} parent=1 // pred_check_branch
      %18 = sbr.rel (0) target = $region5
    $region4: #{tpu_custom_call.1} parent=1 // pred_region
      %20 = vsyncadd [#allocation3], 0
      %s21 = sshll.u32 %s0, 4
      %s22 = int_to_ptr.hbm [resolvable:$true] %s21
      %s23 = sshll.u32 [#allocation2], 4
      %s24 = int_to_ptr.vmem [resolvable:$true] %s23
      %29 = dma.hbm_to_vmem [thread:$0]  %s22, 4096, %s24, [#allocation3], 512, 512, 32
    $region5: #{tpu_custom_call.1} parent=1 // pred_fallthru
      _
    // Predicated region
    $region6: #{tpu_custom_call.1} parent=1 // pred_check
      _
    $region7: #{tpu_custom_call.1} parent=1 // pred_check_branch
      %31 = sbr.rel (0) target = $region9
    $region8: #{tpu_custom_call.1} parent=1 // pred_region
      _
    $region9: #{tpu_custom_call.1} parent=1 // pred_fallthru
      _
    // Predicated region
    $region10: #{tpu_custom_call.1} parent=1 // pred_check
      _
    $region11: #{tpu_custom_call.1} parent=1 // pred_check_branch
      %33 = sbr.rel (0) target = $region13
    $region12: #{tpu_custom_call.1} parent=1 // pred_region
      %35 = vsyncadd [#allocation6], 0
      %s36 = sshll.u32 %s2, 4
      %s37 = int_to_ptr.hbm [resolvable:$true] %s36
      %s38 = sshll.u32 [#allocation5], 4
      %s39 = int_to_ptr.vmem [resolvable:$true] %s38
      %44 = dma.hbm_to_vmem [thread:$0]  %s37, 8192, %s39, [#allocation6], 512, 512, 32
    $region13: #{tpu_custom_call.1} parent=1 // pred_fallthru
      _
    // Predicated region
    $region14: #{tpu_custom_call.1} parent=1 // pred_check
      _
    $region15: #{tpu_custom_call.1} parent=1 // pred_check_branch
      %46 = sbr.rel (0) target = $region17
    $region16: #{tpu_custom_call.1} parent=1 // pred_region
      _
    $region17: #{tpu_custom_call.1} parent=1 // pred_fallthru
      _
    // Predicated region
    $region18: #{tpu_custom_call.1} parent=1 // pred_check
      _
    $region19: #{tpu_custom_call.1} parent=1 // pred_check_branch
      %48 = sbr.rel (0) target = $region21
    $region20: #{tpu_custom_call.1} parent=1 // pred_region
      _
    $region21: #{tpu_custom_call.1} parent=1 // pred_fallthru
      _
    // Predicated region
    $region22: #{tpu_custom_call.1} parent=1 // pred_check
      _
    $region23: #{tpu_custom_call.1} parent=1 // pred_check_branch
      %50 = sbr.rel (0) target = $region25
    $region24: #{tpu_custom_call.1} parent=1 // pred_region
      %52 = vsyncadd [#allocation6], 0
      %s53 = sshll.u32 %s5, 4
      %s54 = int_to_ptr.hbm [resolvable:$true] %s53
      %s55 = sshll.u32 [#allocation7], 4
      %s56 = int_to_ptr.vmem [resolvable:$true] %s55
      %61 = dma.hbm_to_vmem [thread:$0]  %s54, 4096, %s56, [#allocation6], 128, 128, 8
    $region25: #{tpu_custom_call.1} parent=1 // pred_fallthru
      _
    // Predicated region
    $region26: #{tpu_custom_call.1} parent=1 // pred_check
      _
    $region27: #{tpu_custom_call.1} parent=1 // pred_check_branch
      %63 = sbr.rel (0) target = $region29
    $region28: #{tpu_custom_call.1} parent=1 // pred_region
      _
    $region29: #{tpu_custom_call.1} parent=1 // pred_fallthru
      _
    // Predicated region
    $region30: #{tpu_custom_call.1} parent=1 // pred_check
      _
    $region31: #{tpu_custom_call.1} parent=1 // pred_check_branch
      %65 = sbr.rel (0) target = $region33
    $region32: #{tpu_custom_call.1} parent=1 // pred_region
      _
    $region33: #{tpu_custom_call.1} parent=1 // pred_fallthru
      _
    // Predicated region
    $region34: #{tpu_custom_call.1} parent=1 // pred_check
      _
    $region35: #{tpu_custom_call.1} parent=1 // pred_check_branch
      %67 = sbr.rel (0) target = $region37
    $region36: #{tpu_custom_call.1} parent=1 // pred_region
      _
    $region37: #{tpu_custom_call.1} parent=1 // pred_fallthru
      _
    // Predicated region
    $region38: #{tpu_custom_call.1} parent=1 // pred_check
      _
    $region39: #{tpu_custom_call.1} parent=1 // pred_check_branch
      %69 = sbr.rel (0) target = $region41
    $region40: #{tpu_custom_call.1} parent=1 // pred_region
      %71 = dma.done [#allocation3], 4096
    $region41: #{tpu_custom_call.1} parent=1 // pred_fallthru
      _
    // Predicated region
    $region42: #{tpu_custom_call.1} parent=1 // pred_check
      _
    $region43: #{tpu_custom_call.1} parent=1 // pred_check_branch
      %73 = sbr.rel (0) target = $region45
    $region44: #{tpu_custom_call.1} parent=1 // pred_region
      %75 = dma.done [#allocation6], 8192
    $region45: #{tpu_custom_call.1} parent=1 // pred_fallthru
      _
    // Predicated region
    $region46: #{tpu_custom_call.1} parent=1 // pred_check
      _
    $region47: #{tpu_custom_call.1} parent=1 // pred_check_branch
      %77 = sbr.rel (0) target = $region49
    $region48: #{tpu_custom_call.1} parent=1 // pred_region
      %79 = dma.done [#allocation6], 4096
    $region49: #{tpu_custom_call.1} parent=1 // pred_fallthru
      _
    %v80 = vld [vmem:[%s1] sm:$0xff]
    %v81 = vld [vmem:[%s3] sm:$0xff]
    %v82 = vld [vmem:[%s3 + $0x8] sm:$0xff]
    %v83 = vld [vmem:[%s3 + $0x10] sm:$0xff]
    %v84 = vld [vmem:[%s3 + $0x18] sm:$0xff]
    %v85 = vld [vmem:[%s3 + $0x20] sm:$0xff]
    %v86 = vld [vmem:[%s3 + $0x28] sm:$0xff]
    %v87 = vld [vmem:[%s3 + $0x30] sm:$0xff]
    %v88 = vld [vmem:[%s3 + $0x38] sm:$0xff]
    %v89 = vld [vmem:[%s4] sm:$0x1]
    %v91 = vperm.slane %v89, 0
    %vm93 = vcmask 523264
    %v95 = vsel %vm93, %v80, 0
    %97 = vmatpush.msra.mxu0 0.0
    %98 = vmatpush.msra.mxu0 0.0
    %99 = vmatpush.msra.mxu0 0.0
    %100 = vmatpush.msra.mxu0 0.0
    %101 = vmatpush.msra.mxu0 0.0
    %102 = vmatpush.msra.mxu0 0.0
    %103 = vmatpush.msra.mxu0 0.0
    %104 = vmatpush.msra.mxu0 0.0
    %105 = vmatpush.msra.mxu0 %v88
    %106 = vmatpush.msra.mxu0 %v87
    %107 = vmatpush.msra.mxu0 %v86
    %108 = vmatpush.msra.mxu0 %v85
    %109 = vmatpush.msra.mxu0 %v84
    %110 = vmatpush.msra.mxu0 %v83
    %111 = vmatpush.msra.mxu0 %v82
    %112 = vmatpush.msra.mxu0 %v81
    %113 = vmatmul.f32.gmra.mxu0 %v95
    %v114 = vpop.f32.mrf.mxu0
    %v115 = vadd.f32 %v91, %v114
    %116 = vdwg.mxu0
    %v117 = vld [vmem:[#allocation7 + $0x80] sm:$0xff]
    %v118 = vld [vmem:[#allocation7 + $0x88] sm:$0xff]
    %v119 = vld [vmem:[#allocation7 + $0x90] sm:$0xff]
    %v120 = vld [vmem:[#allocation7 + $0x98] sm:$0xff]
    %v121 = vld [vmem:[#allocation7 + $0xa0] sm:$0xff]
    %v122 = vld [vmem:[#allocation7 + $0xa8] sm:$0xff]
    %v123 = vld [vmem:[#allocation7 + $0xb0] sm:$0xff]
    %v124 = vld [vmem:[#allocation7 + $0xb8] sm:$0xff]
    %v125 = vld [vmem:[#allocation7 + $0xc0] sm:$0xff]
    %v126 = vld [vmem:[#allocation7 + $0xc8] sm:$0xff]
    %v127 = vld [vmem:[#allocation7 + $0xd0] sm:$0xff]
    %v128 = vld [vmem:[#allocation7 + $0xd8] sm:$0xff]
    %v129 = vld [vmem:[#allocation7 + $0xe0] sm:$0xff]
    %v130 = vld [vmem:[#allocation7 + $0xe8] sm:$0xff]
    %v131 = vld [vmem:[#allocation7 + $0xf0] sm:$0xff]
    %v132 = vld [vmem:[#allocation7 + $0xf8] sm:$0xff]
    %v133 = vld [vmem:[%s6] sm:$0x1]
    %v135 = vperm.slane %v133, 0
    %137 = vmatpush.msra.mxu0 %v132
    %138 = vmatpush.msra.mxu0 %v131
    %139 = vmatpush.msra.mxu0 %v130
    %140 = vmatpush.msra.mxu0 %v129
    %141 = vmatpush.msra.mxu0 %v128
    %142 = vmatpush.msra.mxu0 %v127
    %143 = vmatpush.msra.mxu0 %v126
    %144 = vmatpush.msra.mxu0 %v125
    %145 = vmatpush.msra.mxu0 %v124
    %146 = vmatpush.msra.mxu0 %v123
    %147 = vmatpush.msra.mxu0 %v122
    %148 = vmatpush.msra.mxu0 %v121
    %149 = vmatpush.msra.mxu0 %v120
    %150 = vmatpush.msra.mxu0 %v119
    %151 = vmatpush.msra.mxu0 %v118
    %152 = vmatpush.msra.mxu0 %v117
    %153 = vmatmul.f32.gmra.mxu0 %v115
    %v154 = vpop.f32.mrf.mxu0
    %v155 = vadd.f32 %v135, %v154
    %156 = vdwg.mxu0
    %v157 = vld [vmem:[#allocation5] sm:$0xff]
    %v158 = vld [vmem:[#allocation5 + $0x8] sm:$0xff]
    %v159 = vld [vmem:[#allocation5 + $0x10] sm:$0xff]
    %v160 = vld [vmem:[#allocation5 + $0x18] sm:$0xff]
    %v161 = vld [vmem:[#allocation5 + $0x20] sm:$0xff]
    %v162 = vld [vmem:[#allocation5 + $0x28] sm:$0xff]
    %v163 = vld [vmem:[#allocation5 + $0x30] sm:$0xff]
    %v164 = vld [vmem:[#allocation5 + $0x38] sm:$0xff]
    %v165 = vld [vmem:[#allocation5 + $0x40] sm:$0xff]
    %v166 = vld [vmem:[#allocation5 + $0x48] sm:$0xff]
    %v167 = vld [vmem:[#allocation5 + $0x50] sm:$0xff]
    %v168 = vld [vmem:[#allocation5 + $0x58] sm:$0xff]
    %v169 = vld [vmem:[#allocation5 + $0x60] sm:$0xff]
    %v170 = vld [vmem:[#allocation5 + $0x68] sm:$0xff]
    %v171 = vld [vmem:[#allocation5 + $0x70] sm:$0xff]
    %v172 = vld [vmem:[#allocation5 + $0x78] sm:$0xff]
    %v173 = vld [vmem:[#allocation5 + $0x80] sm:$0xff]
    %v174 = vld [vmem:[#allocation5 + $0x88] sm:$0xff]
    %v175 = vld [vmem:[#allocation5 + $0x90] sm:$0xff]
    %v176 = vld [vmem:[#allocation5 + $0x98] sm:$0xff]
    %v177 = vld [vmem:[#allocation5 + $0xa0] sm:$0xff]
    %v178 = vld [vmem:[#allocation5 + $0xa8] sm:$0xff]
    %v179 = vld [vmem:[#allocation5 + $0xb0] sm:$0xff]
    %v180 = vld [vmem:[#allocation5 + $0xb8] sm:$0xff]
    %v181 = vld [vmem:[#allocation5 + $0xc0] sm:$0xff]
    %v182 = vld [vmem:[#allocation5 + $0xc8] sm:$0xff]
    %v183 = vld [vmem:[#allocation5 + $0xd0] sm:$0xff]
    %v184 = vld [vmem:[#allocation5 + $0xd8] sm:$0xff]
    %v185 = vld [vmem:[#allocation5 + $0xe0] sm:$0xff]
    %v186 = vld [vmem:[#allocation5 + $0xe8] sm:$0xff]
    %v187 = vld [vmem:[#allocation5 + $0xf0] sm:$0xff]
    %v188 = vld [vmem:[#allocation5 + $0xf8] sm:$0xff]
    %v189 = vld [vmem:[#allocation5 + $0x100] sm:$0xff]
    %v190 = vld [vmem:[#allocation5 + $0x108] sm:$0xff]
    %v191 = vld [vmem:[#allocation5 + $0x110] sm:$0xff]
    %v192 = vld [vmem:[#allocation5 + $0x118] sm:$0xff]
    %v193 = vld [vmem:[#allocation5 + $0x120] sm:$0xff]
    %v194 = vld [vmem:[#allocation5 + $0x128] sm:$0xff]
    %v195 = vld [vmem:[#allocation5 + $0x130] sm:$0xff]
    %v196 = vld [vmem:[#allocation5 + $0x138] sm:$0xff]
    %v197 = vld [vmem:[#allocation5 + $0x140] sm:$0xff]
    %v198 = vld [vmem:[#allocation5 + $0x148] sm:$0xff]
    %v199 = vld [vmem:[#allocation5 + $0x150] sm:$0xff]
    %v200 = vld [vmem:[#allocation5 + $0x158] sm:$0xff]
    %v201 = vld [vmem:[#allocation5 + $0x160] sm:$0xff]
    %v202 = vld [vmem:[#allocation5 + $0x168] sm:$0xff]
    %v203 = vld [vmem:[#allocation5 + $0x170] sm:$0xff]
    %v204 = vld [vmem:[#allocation5 + $0x178] sm:$0xff]
    %v205 = vld [vmem:[#allocation5 + $0x180] sm:$0xff]
    %v206 = vld [vmem:[#allocation5 + $0x188] sm:$0xff]
    %v207 = vld [vmem:[#allocation5 + $0x190] sm:$0xff]
    %v208 = vld [vmem:[#allocation5 + $0x198] sm:$0xff]
    %v209 = vld [vmem:[#allocation5 + $0x1a0] sm:$0xff]
    %v210 = vld [vmem:[#allocation5 + $0x1a8] sm:$0xff]
    %v211 = vld [vmem:[#allocation5 + $0x1b0] sm:$0xff]
    %v212 = vld [vmem:[#allocation5 + $0x1b8] sm:$0xff]
    %v213 = vld [vmem:[#allocation5 + $0x1c0] sm:$0xff]
    %v214 = vld [vmem:[#allocation5 + $0x1c8] sm:$0xff]
    %v215 = vld [vmem:[#allocation5 + $0x1d0] sm:$0xff]
    %v216 = vld [vmem:[#allocation5 + $0x1d8] sm:$0xff]
    %v217 = vld [vmem:[#allocation5 + $0x1e0] sm:$0xff]
    %v218 = vld [vmem:[#allocation5 + $0x1e8] sm:$0xff]
    %v219 = vld [vmem:[#allocation5 + $0x1f0] sm:$0xff]
    %v220 = vld [vmem:[#allocation5 + $0x1f8] sm:$0xff]
    %v221 = vld [vmem:[#allocation2] sm:$0xff]
    %v222 = vld [vmem:[#allocation2 + $0x8] sm:$0xff]
    %v223 = vld [vmem:[#allocation2 + $0x10] sm:$0xff]
    %v224 = vld [vmem:[#allocation2 + $0x18] sm:$0xff]
    %225 = vmatpush.msra.mxu0 %v217
    %226 = vmatpush.msra.mxu0 %v213
    %227 = vmatpush.msra.mxu0 %v209
    %228 = vmatpush.msra.mxu0 %v205
    %229 = vmatpush.msra.mxu0 %v201
    %230 = vmatpush.msra.mxu0 %v197
    %231 = vmatpush.msra.mxu0 %v193
    %232 = vmatpush.msra.mxu0 %v189
    %233 = vmatpush.msra.mxu0 %v185
    %234 = vmatpush.msra.mxu0 %v181
    %235 = vmatpush.msra.mxu0 %v177
    %236 = vmatpush.msra.mxu0 %v173
    %237 = vmatpush.msra.mxu0 %v169
    %238 = vmatpush.msra.mxu0 %v165
    %239 = vmatpush.msra.mxu0 %v161
    %240 = vmatpush.msra.mxu0 %v157
    %241 = vmatmul.f32.gmra.mxu0 0.0
    %v242 = vpop.f32.mrf.mxu0
    %v243 = vadd.f32 0.0, %v242
    %244 = vdwg.mxu0
    %245 = vmatpush.msra.mxu0 %v218
    %246 = vmatpush.msra.mxu0 %v214
    %247 = vmatpush.msra.mxu0 %v210
    %248 = vmatpush.msra.mxu0 %v206
    %249 = vmatpush.msra.mxu0 %v202
    %250 = vmatpush.msra.mxu0 %v198
    %251 = vmatpush.msra.mxu0 %v194
    %252 = vmatpush.msra.mxu0 %v190
    %253 = vmatpush.msra.mxu0 %v186
    %254 = vmatpush.msra.mxu0 %v182
    %255 = vmatpush.msra.mxu0 %v178
    %256 = vmatpush.msra.mxu0 %v174
    %257 = vmatpush.msra.mxu0 %v170
    %258 = vmatpush.msra.mxu0 %v166
    %259 = vmatpush.msra.mxu0 %v162
    %260 = vmatpush.msra.mxu0 %v158
    %261 = vmatmul.f32.gmra.mxu0 0.0
    %v262 = vpop.f32.mrf.mxu0
    %v263 = vadd.f32 0.0, %v262
    %264 = vdwg.mxu0
    %265 = vmatpush.msra.mxu0 %v219
    %266 = vmatpush.msra.mxu0 %v215
    %267 = vmatpush.msra.mxu0 %v211
    %268 = vmatpush.msra.mxu0 %v207
    %269 = vmatpush.msra.mxu0 %v203
    %270 = vmatpush.msra.mxu0 %v199
    %271 = vmatpush.msra.mxu0 %v195
    %272 = vmatpush.msra.mxu0 %v191
    %273 = vmatpush.msra.mxu0 %v187
    %274 = vmatpush.msra.mxu0 %v183
    %275 = vmatpush.msra.mxu0 %v179
    %276 = vmatpush.msra.mxu0 %v175
    %277 = vmatpush.msra.mxu0 %v171
    %278 = vmatpush.msra.mxu0 %v167
    %279 = vmatpush.msra.mxu0 %v163
    %280 = vmatpush.msra.mxu0 %v159
    %281 = vmatmul.f32.gmra.mxu0 0.0
    %v282 = vpop.f32.mrf.mxu0
    %v283 = vadd.f32 0.0, %v282
    %284 = vdwg.mxu0
    %285 = vmatpush.msra.mxu0 %v220
    %286 = vmatpush.msra.mxu0 %v216
    %287 = vmatpush.msra.mxu0 %v212
    %288 = vmatpush.msra.mxu0 %v208
    %289 = vmatpush.msra.mxu0 %v204
    %290 = vmatpush.msra.mxu0 %v200
    %291 = vmatpush.msra.mxu0 %v196
    %292 = vmatpush.msra.mxu0 %v192
    %293 = vmatpush.msra.mxu0 %v188
    %294 = vmatpush.msra.mxu0 %v184
    %295 = vmatpush.msra.mxu0 %v180
    %296 = vmatpush.msra.mxu0 %v176
    %297 = vmatpush.msra.mxu0 %v172
    %298 = vmatpush.msra.mxu0 %v168
    %299 = vmatpush.msra.mxu0 %v164
    %300 = vmatpush.msra.mxu0 %v160
    %301 = vmatmul.f32.gmra.mxu0 0.0
    %v302 = vpop.f32.mrf.mxu0
    %v303 = vadd.f32 0.0, %v302
    %304 = vdwg.mxu0
    %v305 = vadd.f32 %v221, %v243
    %v306 = vadd.f32 %v222, %v263
    %v307 = vadd.f32 %v223, %v283
    %v308 = vadd.f32 %v224, %v303
    %v309 = vxor.u32 %v305, 2147483648
    %v310 = vmul.f32 %v309, 1.442695
    %v311 = vpow.pop %v310
    %v312 = vadd.f32 %v311, 1.0
    %v313 = vrcp.pop %v312
    %v314 = vmul.f32 %v312, %v313
    %v315 = vsub.f32 1.0, %v314
    %v316 = vmul.f32 %v313, %v315
    %v317 = vadd.f32 %v313, %v316
    %vm318 = vweird.f32 %v312
    %vm319 = vweird.f32 %v313
    %vm320 = vmor %vm318, %vm319
    %v321 = vsel %vm320, %v313, %v317
    %v322 = vand.u32 2147483647, %v312
    %vm323 = vcmp.eq.f32.partialorder %v322, 8.507059e+37
    %v324 = vand.u32 %v312, 2147483648
    %v325 = vor.u32 1.1754944e-38, %v324
    %v326 = vsel %vm323, %v325, %v321
    %v327 = vmul.f32 1.0, %v326
    %v328 = vxor.u32 %v306, 2147483648
    %v329 = vmul.f32 %v328, 1.442695
    %v330 = vpow.pop %v329
    %v331 = vadd.f32 %v330, 1.0
    %v332 = vrcp.pop %v331
    %v333 = vmul.f32 %v331, %v332
    %v334 = vsub.f32 1.0, %v333
    %v335 = vmul.f32 %v332, %v334
    %v336 = vadd.f32 %v332, %v335
    %vm337 = vweird.f32 %v331
    %vm338 = vweird.f32 %v332
    %vm339 = vmor %vm337, %vm338
    %v340 = vsel %vm339, %v332, %v336
    %v341 = vand.u32 2147483647, %v331
    %vm342 = vcmp.eq.f32.partialorder %v341, 8.507059e+37
    %v343 = vand.u32 %v331, 2147483648
    %v344 = vor.u32 1.1754944e-38, %v343
    %v345 = vsel %vm342, %v344, %v340
    %v346 = vmul.f32 1.0, %v345
    %v347 = vtanh.pop %v307
    %v348 = vxor.u32 %v308, 2147483648
    %v349 = vmul.f32 %v348, 1.442695
    %v350 = vpow.pop %v349
    %v351 = vadd.f32 %v350, 1.0
    %v352 = vrcp.pop %v351
    %v353 = vmul.f32 %v351, %v352
    %v354 = vsub.f32 1.0, %v353
    %v355 = vmul.f32 %v352, %v354
    %v356 = vadd.f32 %v352, %v355
    %vm357 = vweird.f32 %v351
    %vm358 = vweird.f32 %v352
    %vm359 = vmor %vm357, %vm358
    %v360 = vsel %vm359, %v352, %v356
    %v361 = vand.u32 2147483647, %v351
    %vm362 = vcmp.eq.f32.partialorder %v361, 8.507059e+37
    %v363 = vand.u32 %v351, 2147483648
    %v364 = vor.u32 1.1754944e-38, %v363
    %v365 = vsel %vm362, %v364, %v360
    %v366 = vmul.f32 1.0, %v365
    %v367 = vmul.f32 %v346, 0.0
    %v368 = vmul.f32 %v327, %v347
    %v369 = vadd.f32 %v367, %v368
    %v370 = vtanh.pop %v369
    %v371 = vmul.f32 %v366, %v370
    %s372 = scalar_lea.vmem [#allocation2], 32
    %v373 = vld [vmem:[%s372] sm:$0xff]
    %v374 = vld [vmem:[%s372 + $0x8] sm:$0xff]
    %v375 = vld [vmem:[%s372 + $0x10] sm:$0xff]
    %v376 = vld [vmem:[%s372 + $0x18] sm:$0xff]
    %377 = vmatpush.msra.mxu0 %v217
    %378 = vmatpush.msra.mxu0 %v213
    %379 = vmatpush.msra.mxu0 %v209
    %380 = vmatpush.msra.mxu0 %v205
    %381 = vmatpush.msra.mxu0 %v201
    %382 = vmatpush.msra.mxu0 %v197
    %383 = vmatpush.msra.mxu0 %v193
    %384 = vmatpush.msra.mxu0 %v189
    %385 = vmatpush.msra.mxu0 %v185
    %386 = vmatpush.msra.mxu0 %v181
    %387 = vmatpush.msra.mxu0 %v177
    %388 = vmatpush.msra.mxu0 %v173
    %389 = vmatpush.msra.mxu0 %v169
    %390 = vmatpush.msra.mxu0 %v165
    %391 = vmatpush.msra.mxu0 %v161
    %392 = vmatpush.msra.mxu0 %v157
    %393 = vmatmul.f32.gmra.mxu0 %v371
    %v394 = vpop.f32.mrf.mxu0
    %v395 = vadd.f32 0.0, %v394
    %396 = vdwg.mxu0
    %397 = vmatpush.msra.mxu0 %v218
    %398 = vmatpush.msra.mxu0 %v214
    %399 = vmatpush.msra.mxu0 %v210
    %400 = vmatpush.msra.mxu0 %v206
    %401 = vmatpush.msra.mxu0 %v202
    %402 = vmatpush.msra.mxu0 %v198
    %403 = vmatpush.msra.mxu0 %v194
    %404 = vmatpush.msra.mxu0 %v190
    %405 = vmatpush.msra.mxu0 %v186
    %406 = vmatpush.msra.mxu0 %v182
    %407 = vmatpush.msra.mxu0 %v178
    %408 = vmatpush.msra.mxu0 %v174
    %409 = vmatpush.msra.mxu0 %v170
    %410 = vmatpush.msra.mxu0 %v166
    %411 = vmatpush.msra.mxu0 %v162
    %412 = vmatpush.msra.mxu0 %v158
    %413 = vmatmul.f32.gmra.mxu0 %v371
    %v414 = vpop.f32.mrf.mxu0
    %v415 = vadd.f32 0.0, %v414
    %416 = vdwg.mxu0
    %417 = vmatpush.msra.mxu0 %v219
    %418 = vmatpush.msra.mxu0 %v215
    %419 = vmatpush.msra.mxu0 %v211
    %420 = vmatpush.msra.mxu0 %v207
    %421 = vmatpush.msra.mxu0 %v203
    %422 = vmatpush.msra.mxu0 %v199
    %423 = vmatpush.msra.mxu0 %v195
    %424 = vmatpush.msra.mxu0 %v191
    %425 = vmatpush.msra.mxu0 %v187
    %426 = vmatpush.msra.mxu0 %v183
    %427 = vmatpush.msra.mxu0 %v179
    %428 = vmatpush.msra.mxu0 %v175
    %429 = vmatpush.msra.mxu0 %v171
    %430 = vmatpush.msra.mxu0 %v167
    %431 = vmatpush.msra.mxu0 %v163
    %432 = vmatpush.msra.mxu0 %v159
    %433 = vmatmul.f32.gmra.mxu0 %v371
    %v434 = vpop.f32.mrf.mxu0
    %v435 = vadd.f32 0.0, %v434
    %436 = vdwg.mxu0
    %437 = vmatpush.msra.mxu0 %v220
    %438 = vmatpush.msra.mxu0 %v216
    %439 = vmatpush.msra.mxu0 %v212
    %440 = vmatpush.msra.mxu0 %v208
    %441 = vmatpush.msra.mxu0 %v204
    %442 = vmatpush.msra.mxu0 %v200
    %443 = vmatpush.msra.mxu0 %v196
    %444 = vmatpush.msra.mxu0 %v192
    %445 = vmatpush.msra.mxu0 %v188
    %446 = vmatpush.msra.mxu0 %v184
    %447 = vmatpush.msra.mxu0 %v180
    %448 = vmatpush.msra.mxu0 %v176
    %449 = vmatpush.msra.mxu0 %v172
    %450 = vmatpush.msra.mxu0 %v168
    %451 = vmatpush.msra.mxu0 %v164
    %452 = vmatpush.msra.mxu0 %v160
    %453 = vmatmul.f32.gmra.mxu0 %v371
    %v454 = vpop.f32.mrf.mxu0
    %v455 = vadd.f32 0.0, %v454
    %456 = vdwg.mxu0
    %v457 = vadd.f32 %v373, %v395
    %v458 = vadd.f32 %v374, %v415
    %v459 = vadd.f32 %v375, %v435
    %v460 = vadd.f32 %v376, %v455
    %v461 = vxor.u32 %v457, 2147483648
    %v462 = vmul.f32 %v461, 1.442695
    %v463 = vpow.pop %v462
    %v464 = vadd.f32 %v463, 1.0
    %v465 = vrcp.pop %v464
    %v466 = vmul.f32 %v464, %v465
    %v467 = vsub.f32 1.0, %v466
    %v468 = vmul.f32 %v465, %v467
    %v469 = vadd.f32 %v465, %v468
    %vm470 = vweird.f32 %v464
    %vm471 = vweird.f32 %v465
    %vm472 = vmor %vm470, %vm471
    %v473 = vsel %vm472, %v465, %v469
    %v474 = vand.u32 2147483647, %v464
    %vm475 = vcmp.eq.f32.partialorder %v474, 8.507059e+37
    %v476 = vand.u32 %v464, 2147483648
    %v477 = vor.u32 1.1754944e-38, %v476
    %v478 = vsel %vm475, %v477, %v473
    %v479 = vmul.f32 1.0, %v478
    %v480 = vxor.u32 %v458, 2147483648
    %v481 = vmul.f32 %v480, 1.442695
    %v482 = vpow.pop %v481
    %v483 = vadd.f32 %v482, 1.0
    %v484 = vrcp.pop %v483
    %v485 = vmul.f32 %v483, %v484
    %v486 = vsub.f32 1.0, %v485
    %v487 = vmul.f32 %v484, %v486
    %v488 = vadd.f32 %v484, %v487
    %vm489 = vweird.f32 %v483
    %vm490 = vweird.f32 %v484
    %vm491 = vmor %vm489, %vm490
    %v492 = vsel %vm491, %v484, %v488
    %v493 = vand.u32 2147483647, %v483
    %vm494 = vcmp.eq.f32.partialorder %v493, 8.507059e+37
    %v495 = vand.u32 %v483, 2147483648
    %v496 = vor.u32 1.1754944e-38, %v495
    %v497 = vsel %vm494, %v496, %v492
    %v498 = vmul.f32 1.0, %v497
    %v499 = vtanh.pop %v459
    %v500 = vxor.u32 %v460, 2147483648
    %v501 = vmul.f32 %v500, 1.442695
    %v502 = vpow.pop %v501
    %v503 = vadd.f32 %v502, 1.0
    %v504 = vrcp.pop %v503
    %v505 = vmul.f32 %v503, %v504
    %v506 = vsub.f32 1.0, %v505
    %v507 = vmul.f32 %v504, %v506
    %v508 = vadd.f32 %v504, %v507
    %vm509 = vweird.f32 %v503
    %vm510 = vweird.f32 %v504
    %vm511 = vmor %vm509, %vm510
    %v512 = vsel %vm511, %v504, %v508
    %v513 = vand.u32 2147483647, %v503
    %vm514 = vcmp.eq.f32.partialorder %v513, 8.507059e+37
    %v515 = vand.u32 %v503, 2147483648
    %v516 = vor.u32 1.1754944e-38, %v515
    %v517 = vsel %vm514, %v516, %v512
    %v518 = vmul.f32 1.0, %v517
    %v519 = vmul.f32 %v498, %v369
    %v520 = vmul.f32 %v479, %v499
    %v521 = vadd.f32 %v519, %v520
    %v522 = vtanh.pop %v521
    %v523 = vmul.f32 %v518, %v522
    %s524 = scalar_lea.vmem [#allocation2], 64
    %v525 = vld [vmem:[%s524] sm:$0xff]
    %v526 = vld [vmem:[%s524 + $0x8] sm:$0xff]
    %v527 = vld [vmem:[%s524 + $0x10] sm:$0xff]
    %v528 = vld [vmem:[%s524 + $0x18] sm:$0xff]
    %529 = vmatpush.msra.mxu0 %v217
    %530 = vmatpush.msra.mxu0 %v213
    %531 = vmatpush.msra.mxu0 %v209
    %532 = vmatpush.msra.mxu0 %v205
    %533 = vmatpush.msra.mxu0 %v201
    %534 = vmatpush.msra.mxu0 %v197
    %535 = vmatpush.msra.mxu0 %v193
    %536 = vmatpush.msra.mxu0 %v189
    %537 = vmatpush.msra.mxu0 %v185
    %538 = vmatpush.msra.mxu0 %v181
    %539 = vmatpush.msra.mxu0 %v177
    %540 = vmatpush.msra.mxu0 %v173
    %541 = vmatpush.msra.mxu0 %v169
    %542 = vmatpush.msra.mxu0 %v165
    %543 = vmatpush.msra.mxu0 %v161
    %544 = vmatpush.msra.mxu0 %v157
    %545 = vmatmul.f32.gmra.mxu0 %v523
    %v546 = vpop.f32.mrf.mxu0
    %v547 = vadd.f32 0.0, %v546
    %548 = vdwg.mxu0
    %549 = vmatpush.msra.mxu0 %v218
    %550 = vmatpush.msra.mxu0 %v214
    %551 = vmatpush.msra.mxu0 %v210
    %552 = vmatpush.msra.mxu0 %v206
    %553 = vmatpush.msra.mxu0 %v202
    %554 = vmatpush.msra.mxu0 %v198
    %555 = vmatpush.msra.mxu0 %v194
    %556 = vmatpush.msra.mxu0 %v190
    %557 = vmatpush.msra.mxu0 %v186
    %558 = vmatpush.msra.mxu0 %v182
    %559 = vmatpush.msra.mxu0 %v178
    %560 = vmatpush.msra.mxu0 %v174
    %561 = vmatpush.msra.mxu0 %v170
    %562 = vmatpush.msra.mxu0 %v166
    %563 = vmatpush.msra.mxu0 %v162
    %564 = vmatpush.msra.mxu0 %v158
    %565 = vmatmul.f32.gmra.mxu0 %v523
    %v566 = vpop.f32.mrf.mxu0
    %v567 = vadd.f32 0.0, %v566
    %568 = vdwg.mxu0
    %569 = vmatpush.msra.mxu0 %v219
    %570 = vmatpush.msra.mxu0 %v215
    %571 = vmatpush.msra.mxu0 %v211
    %572 = vmatpush.msra.mxu0 %v207
    %573 = vmatpush.msra.mxu0 %v203
    %574 = vmatpush.msra.mxu0 %v199
    %575 = vmatpush.msra.mxu0 %v195
    %576 = vmatpush.msra.mxu0 %v191
    %577 = vmatpush.msra.mxu0 %v187
    %578 = vmatpush.msra.mxu0 %v183
    %579 = vmatpush.msra.mxu0 %v179
    %580 = vmatpush.msra.mxu0 %v175
    %581 = vmatpush.msra.mxu0 %v171
    %582 = vmatpush.msra.mxu0 %v167
    %583 = vmatpush.msra.mxu0 %v163
    %584 = vmatpush.msra.mxu0 %v159
    %585 = vmatmul.f32.gmra.mxu0 %v523
    %v586 = vpop.f32.mrf.mxu0
    %v587 = vadd.f32 0.0, %v586
    %588 = vdwg.mxu0
    %589 = vmatpush.msra.mxu0 %v220
    %590 = vmatpush.msra.mxu0 %v216
    %591 = vmatpush.msra.mxu0 %v212
    %592 = vmatpush.msra.mxu0 %v208
    %593 = vmatpush.msra.mxu0 %v204
    %594 = vmatpush.msra.mxu0 %v200
    %595 = vmatpush.msra.mxu0 %v196
    %596 = vmatpush.msra.mxu0 %v192
    %597 = vmatpush.msra.mxu0 %v188
    %598 = vmatpush.msra.mxu0 %v184
    %599 = vmatpush.msra.mxu0 %v180
    %600 = vmatpush.msra.mxu0 %v176
    %601 = vmatpush.msra.mxu0 %v172
    %602 = vmatpush.msra.mxu0 %v168
    %603 = vmatpush.msra.mxu0 %v164
    %604 = vmatpush.msra.mxu0 %v160
    %605 = vmatmul.f32.gmra.mxu0 %v523
    %v606 = vpop.f32.mrf.mxu0
    %v607 = vadd.f32 0.0, %v606
    %608 = vdwg.mxu0
    %v609 = vadd.f32 %v525, %v547
    %v610 = vadd.f32 %v526, %v567
    %v611 = vadd.f32 %v527, %v587
    %v612 = vadd.f32 %v528, %v607
    %v613 = vxor.u32 %v609, 2147483648
    %v614 = vmul.f32 %v613, 1.442695
    %v615 = vpow.pop %v614
    %v616 = vadd.f32 %v615, 1.0
    %v617 = vrcp.pop %v616
    %v618 = vmul.f32 %v616, %v617
    %v619 = vsub.f32 1.0, %v618
    %v620 = vmul.f32 %v617, %v619
    %v621 = vadd.f32 %v617, %v620
    %vm622 = vweird.f32 %v616
    %vm623 = vweird.f32 %v617
    %vm624 = vmor %vm622, %vm623
    %v625 = vsel %vm624, %v617, %v621
    %v626 = vand.u32 2147483647, %v616
    %vm627 = vcmp.eq.f32.partialorder %v626, 8.507059e+37
    %v628 = vand.u32 %v616, 2147483648
    %v629 = vor.u32 1.1754944e-38, %v628
    %v630 = vsel %vm627, %v629, %v625
    %v631 = vmul.f32 1.0, %v630
    %v632 = vxor.u32 %v610, 2147483648
    %v633 = vmul.f32 %v632, 1.442695
    %v634 = vpow.pop %v633
    %v635 = vadd.f32 %v634, 1.0
    %v636 = vrcp.pop %v635
    %v637 = vmul.f32 %v635, %v636
    %v638 = vsub.f32 1.0, %v637
    %v639 = vmul.f32 %v636, %v638
    %v640 = vadd.f32 %v636, %v639
    %vm641 = vweird.f32 %v635
    %vm642 = vweird.f32 %v636
    %vm643 = vmor %vm641, %vm642
    %v644 = vsel %vm643, %v636, %v640
    %v645 = vand.u32 2147483647, %v635
    %vm646 = vcmp.eq.f32.partialorder %v645, 8.507059e+37
    %v647 = vand.u32 %v635, 2147483648
    %v648 = vor.u32 1.1754944e-38, %v647
    %v649 = vsel %vm646, %v648, %v644
    %v650 = vmul.f32 1.0, %v649
    %v651 = vtanh.pop %v611
    %v652 = vxor.u32 %v612, 2147483648
    %v653 = vmul.f32 %v652, 1.442695
    %v654 = vpow.pop %v653
    %v655 = vadd.f32 %v654, 1.0
    %v656 = vrcp.pop %v655
    %v657 = vmul.f32 %v655, %v656
    %v658 = vsub.f32 1.0, %v657
    %v659 = vmul.f32 %v656, %v658
    %v660 = vadd.f32 %v656, %v659
    %vm661 = vweird.f32 %v655
    %vm662 = vweird.f32 %v656
    %vm663 = vmor %vm661, %vm662
    %v664 = vsel %vm663, %v656, %v660
    %v665 = vand.u32 2147483647, %v655
    %vm666 = vcmp.eq.f32.partialorder %v665, 8.507059e+37
    %v667 = vand.u32 %v655, 2147483648
    %v668 = vor.u32 1.1754944e-38, %v667
    %v669 = vsel %vm666, %v668, %v664
    %v670 = vmul.f32 1.0, %v669
    %v671 = vmul.f32 %v650, %v521
    %v672 = vmul.f32 %v631, %v651
    %v673 = vadd.f32 %v671, %v672
    %v674 = vtanh.pop %v673
    %v675 = vmul.f32 %v670, %v674
    %s676 = scalar_lea.vmem [#allocation2], 96
    %v677 = vld [vmem:[%s676] sm:$0xff]
    %v678 = vld [vmem:[%s676 + $0x8] sm:$0xff]
    %v679 = vld [vmem:[%s676 + $0x10] sm:$0xff]
    %v680 = vld [vmem:[%s676 + $0x18] sm:$0xff]
    %681 = vmatpush.msra.mxu0 %v217
    %682 = vmatpush.msra.mxu0 %v213
    %683 = vmatpush.msra.mxu0 %v209
    %684 = vmatpush.msra.mxu0 %v205
    %685 = vmatpush.msra.mxu0 %v201
    %686 = vmatpush.msra.mxu0 %v197
    %687 = vmatpush.msra.mxu0 %v193
    %688 = vmatpush.msra.mxu0 %v189
    %689 = vmatpush.msra.mxu0 %v185
    %690 = vmatpush.msra.mxu0 %v181
    %691 = vmatpush.msra.mxu0 %v177
    %692 = vmatpush.msra.mxu0 %v173
    %693 = vmatpush.msra.mxu0 %v169
    %694 = vmatpush.msra.mxu0 %v165
    %695 = vmatpush.msra.mxu0 %v161
    %696 = vmatpush.msra.mxu0 %v157
    %697 = vmatmul.f32.gmra.mxu0 %v675
    %v698 = vpop.f32.mrf.mxu0
    %v699 = vadd.f32 0.0, %v698
    %700 = vdwg.mxu0
    %701 = vmatpush.msra.mxu0 %v218
    %702 = vmatpush.msra.mxu0 %v214
    %703 = vmatpush.msra.mxu0 %v210
    %704 = vmatpush.msra.mxu0 %v206
    %705 = vmatpush.msra.mxu0 %v202
    %706 = vmatpush.msra.mxu0 %v198
    %707 = vmatpush.msra.mxu0 %v194
    %708 = vmatpush.msra.mxu0 %v190
    %709 = vmatpush.msra.mxu0 %v186
    %710 = vmatpush.msra.mxu0 %v182
    %711 = vmatpush.msra.mxu0 %v178
    %712 = vmatpush.msra.mxu0 %v174
    %713 = vmatpush.msra.mxu0 %v170
    %714 = vmatpush.msra.mxu0 %v166
    %715 = vmatpush.msra.mxu0 %v162
    %716 = vmatpush.msra.mxu0 %v158
    %717 = vmatmul.f32.gmra.mxu0 %v675
    %v718 = vpop.f32.mrf.mxu0
    %v719 = vadd.f32 0.0, %v718
    %720 = vdwg.mxu0
    %721 = vmatpush.msra.mxu0 %v219
    %722 = vmatpush.msra.mxu0 %v215
    %723 = vmatpush.msra.mxu0 %v211
    %724 = vmatpush.msra.mxu0 %v207
    %725 = vmatpush.msra.mxu0 %v203
    %726 = vmatpush.msra.mxu0 %v199
    %727 = vmatpush.msra.mxu0 %v195
    %728 = vmatpush.msra.mxu0 %v191
    %729 = vmatpush.msra.mxu0 %v187
    %730 = vmatpush.msra.mxu0 %v183
    %731 = vmatpush.msra.mxu0 %v179
    %732 = vmatpush.msra.mxu0 %v175
    %733 = vmatpush.msra.mxu0 %v171
    %734 = vmatpush.msra.mxu0 %v167
    %735 = vmatpush.msra.mxu0 %v163
    %736 = vmatpush.msra.mxu0 %v159
    %737 = vmatmul.f32.gmra.mxu0 %v675
    %v738 = vpop.f32.mrf.mxu0
    %v739 = vadd.f32 0.0, %v738
    %740 = vdwg.mxu0
    %741 = vmatpush.msra.mxu0 %v220
    %742 = vmatpush.msra.mxu0 %v216
    %743 = vmatpush.msra.mxu0 %v212
    %744 = vmatpush.msra.mxu0 %v208
    %745 = vmatpush.msra.mxu0 %v204
    %746 = vmatpush.msra.mxu0 %v200
    %747 = vmatpush.msra.mxu0 %v196
    %748 = vmatpush.msra.mxu0 %v192
    %749 = vmatpush.msra.mxu0 %v188
    %750 = vmatpush.msra.mxu0 %v184
    %751 = vmatpush.msra.mxu0 %v180
    %752 = vmatpush.msra.mxu0 %v176
    %753 = vmatpush.msra.mxu0 %v172
    %754 = vmatpush.msra.mxu0 %v168
    %755 = vmatpush.msra.mxu0 %v164
    %756 = vmatpush.msra.mxu0 %v160
    %757 = vmatmul.f32.gmra.mxu0 %v675
    %v758 = vpop.f32.mrf.mxu0
    %v759 = vadd.f32 0.0, %v758
    %760 = vdwg.mxu0
    %v761 = vadd.f32 %v677, %v699
    %v762 = vadd.f32 %v678, %v719
    %v763 = vadd.f32 %v679, %v739
    %v764 = vadd.f32 %v680, %v759
    %v765 = vxor.u32 %v761, 2147483648
    %v766 = vmul.f32 %v765, 1.442695
    %v767 = vpow.pop %v766
    %v768 = vadd.f32 %v767, 1.0
    %v769 = vrcp.pop %v768
    %v770 = vmul.f32 %v768, %v769
    %v771 = vsub.f32 1.0, %v770
    %v772 = vmul.f32 %v769, %v771
    %v773 = vadd.f32 %v769, %v772
    %vm774 = vweird.f32 %v768
    %vm775 = vweird.f32 %v769
    %vm776 = vmor %vm774, %vm775
    %v777 = vsel %vm776, %v769, %v773
    %v778 = vand.u32 2147483647, %v768
    %vm779 = vcmp.eq.f32.partialorder %v778, 8.507059e+37
    %v780 = vand.u32 %v768, 2147483648
    %v781 = vor.u32 1.1754944e-38, %v780
    %v782 = vsel %vm779, %v781, %v777
    %v783 = vmul.f32 1.0, %v782
    %v784 = vxor.u32 %v762, 2147483648
    %v785 = vmul.f32 %v784, 1.442695
    %v786 = vpow.pop %v785
    %v787 = vadd.f32 %v786, 1.0
    %v788 = vrcp.pop %v787
    %v789 = vmul.f32 %v787, %v788
    %v790 = vsub.f32 1.0, %v789
    %v791 = vmul.f32 %v788, %v790
    %v792 = vadd.f32 %v788, %v791
    %vm793 = vweird.f32 %v787
    %vm794 = vweird.f32 %v788
    %vm795 = vmor %vm793, %vm794
    %v796 = vsel %vm795, %v788, %v792
    %v797 = vand.u32 2147483647, %v787
    %vm798 = vcmp.eq.f32.partialorder %v797, 8.507059e+37
    %v799 = vand.u32 %v787, 2147483648
    %v800 = vor.u32 1.1754944e-38, %v799
    %v801 = vsel %vm798, %v800, %v796
    %v802 = vmul.f32 1.0, %v801
    %v803 = vtanh.pop %v763
    %v804 = vxor.u32 %v764, 2147483648
    %v805 = vmul.f32 %v804, 1.442695
    %v806 = vpow.pop %v805
    %v807 = vadd.f32 %v806, 1.0
    %v808 = vrcp.pop %v807
    %v809 = vmul.f32 %v807, %v808
    %v810 = vsub.f32 1.0, %v809
    %v811 = vmul.f32 %v808, %v810
    %v812 = vadd.f32 %v808, %v811
    %vm813 = vweird.f32 %v807
    %vm814 = vweird.f32 %v808
    %vm815 = vmor %vm813, %vm814
    %v816 = vsel %vm815, %v808, %v812
    %v817 = vand.u32 2147483647, %v807
    %vm818 = vcmp.eq.f32.partialorder %v817, 8.507059e+37
    %v819 = vand.u32 %v807, 2147483648
    %v820 = vor.u32 1.1754944e-38, %v819
    %v821 = vsel %vm818, %v820, %v816
    %v822 = vmul.f32 1.0, %v821
    %v823 = vmul.f32 %v802, %v673
    %v824 = vmul.f32 %v783, %v803
    %v825 = vadd.f32 %v823, %v824
    %v826 = vtanh.pop %v825
    %v827 = vmul.f32 %v822, %v826
    %s828 = scalar_lea.vmem [#allocation2], 128
    %v829 = vld [vmem:[%s828] sm:$0xff]
    %v830 = vld [vmem:[%s828 + $0x8] sm:$0xff]
    %v831 = vld [vmem:[%s828 + $0x10] sm:$0xff]
    %v832 = vld [vmem:[%s828 + $0x18] sm:$0xff]
    %833 = vmatpush.msra.mxu0 %v217
    %834 = vmatpush.msra.mxu0 %v213
    %835 = vmatpush.msra.mxu0 %v209
    %836 = vmatpush.msra.mxu0 %v205
    %837 = vmatpush.msra.mxu0 %v201
    %838 = vmatpush.msra.mxu0 %v197
    %839 = vmatpush.msra.mxu0 %v193
    %840 = vmatpush.msra.mxu0 %v189
    %841 = vmatpush.msra.mxu0 %v185
    %842 = vmatpush.msra.mxu0 %v181
    %843 = vmatpush.msra.mxu0 %v177
    %844 = vmatpush.msra.mxu0 %v173
    %845 = vmatpush.msra.mxu0 %v169
    %846 = vmatpush.msra.mxu0 %v165
    %847 = vmatpush.msra.mxu0 %v161
    %848 = vmatpush.msra.mxu0 %v157
    %849 = vmatmul.f32.gmra.mxu0 %v827
    %v850 = vpop.f32.mrf.mxu0
    %v851 = vadd.f32 0.0, %v850
    %852 = vdwg.mxu0
    %853 = vmatpush.msra.mxu0 %v218
    %854 = vmatpush.msra.mxu0 %v214
    %855 = vmatpush.msra.mxu0 %v210
    %856 = vmatpush.msra.mxu0 %v206
    %857 = vmatpush.msra.mxu0 %v202
    %858 = vmatpush.msra.mxu0 %v198
    %859 = vmatpush.msra.mxu0 %v194
    %860 = vmatpush.msra.mxu0 %v190
    %861 = vmatpush.msra.mxu0 %v186
    %862 = vmatpush.msra.mxu0 %v182
    %863 = vmatpush.msra.mxu0 %v178
    %864 = vmatpush.msra.mxu0 %v174
    %865 = vmatpush.msra.mxu0 %v170
    %866 = vmatpush.msra.mxu0 %v166
    %867 = vmatpush.msra.mxu0 %v162
    %868 = vmatpush.msra.mxu0 %v158
    %869 = vmatmul.f32.gmra.mxu0 %v827
    %v870 = vpop.f32.mrf.mxu0
    %v871 = vadd.f32 0.0, %v870
    %872 = vdwg.mxu0
    %873 = vmatpush.msra.mxu0 %v219
    %874 = vmatpush.msra.mxu0 %v215
    %875 = vmatpush.msra.mxu0 %v211
    %876 = vmatpush.msra.mxu0 %v207
    %877 = vmatpush.msra.mxu0 %v203
    %878 = vmatpush.msra.mxu0 %v199
    %879 = vmatpush.msra.mxu0 %v195
    %880 = vmatpush.msra.mxu0 %v191
    %881 = vmatpush.msra.mxu0 %v187
    %882 = vmatpush.msra.mxu0 %v183
    %883 = vmatpush.msra.mxu0 %v179
    %884 = vmatpush.msra.mxu0 %v175
    %885 = vmatpush.msra.mxu0 %v171
    %886 = vmatpush.msra.mxu0 %v167
    %887 = vmatpush.msra.mxu0 %v163
    %888 = vmatpush.msra.mxu0 %v159
    %889 = vmatmul.f32.gmra.mxu0 %v827
    %v890 = vpop.f32.mrf.mxu0
    %v891 = vadd.f32 0.0, %v890
    %892 = vdwg.mxu0
    %893 = vmatpush.msra.mxu0 %v220
    %894 = vmatpush.msra.mxu0 %v216
    %895 = vmatpush.msra.mxu0 %v212
    %896 = vmatpush.msra.mxu0 %v208
    %897 = vmatpush.msra.mxu0 %v204
    %898 = vmatpush.msra.mxu0 %v200
    %899 = vmatpush.msra.mxu0 %v196
    %900 = vmatpush.msra.mxu0 %v192
    %901 = vmatpush.msra.mxu0 %v188
    %902 = vmatpush.msra.mxu0 %v184
    %903 = vmatpush.msra.mxu0 %v180
    %904 = vmatpush.msra.mxu0 %v176
    %905 = vmatpush.msra.mxu0 %v172
    %906 = vmatpush.msra.mxu0 %v168
    %907 = vmatpush.msra.mxu0 %v164
    %908 = vmatpush.msra.mxu0 %v160
    %909 = vmatmul.f32.gmra.mxu0 %v827
    %v910 = vpop.f32.mrf.mxu0
    %v911 = vadd.f32 0.0, %v910
    %912 = vdwg.mxu0
    %v913 = vadd.f32 %v829, %v851
    %v914 = vadd.f32 %v830, %v871
    %v915 = vadd.f32 %v831, %v891
    %v916 = vadd.f32 %v832, %v911
    %v917 = vxor.u32 %v913, 2147483648
    %v918 = vmul.f32 %v917, 1.442695
    %v919 = vpow.pop %v918
    %v920 = vadd.f32 %v919, 1.0
    %v921 = vrcp.pop %v920
    %v922 = vmul.f32 %v920, %v921
    %v923 = vsub.f32 1.0, %v922
    %v924 = vmul.f32 %v921, %v923
    %v925 = vadd.f32 %v921, %v924
    %vm926 = vweird.f32 %v920
    %vm927 = vweird.f32 %v921
    %vm928 = vmor %vm926, %vm927
    %v929 = vsel %vm928, %v921, %v925
    %v930 = vand.u32 2147483647, %v920
    %vm931 = vcmp.eq.f32.partialorder %v930, 8.507059e+37
    %v932 = vand.u32 %v920, 2147483648
    %v933 = vor.u32 1.1754944e-38, %v932
    %v934 = vsel %vm931, %v933, %v929
    %v935 = vmul.f32 1.0, %v934
    %v936 = vxor.u32 %v914, 2147483648
    %v937 = vmul.f32 %v936, 1.442695
    %v938 = vpow.pop %v937
    %v939 = vadd.f32 %v938, 1.0
    %v940 = vrcp.pop %v939
    %v941 = vmul.f32 %v939, %v940
    %v942 = vsub.f32 1.0, %v941
    %v943 = vmul.f32 %v940, %v942
    %v944 = vadd.f32 %v940, %v943
    %vm945 = vweird.f32 %v939
    %vm946 = vweird.f32 %v940
    %vm947 = vmor %vm945, %vm946
    %v948 = vsel %vm947, %v940, %v944
    %v949 = vand.u32 2147483647, %v939
    %vm950 = vcmp.eq.f32.partialorder %v949, 8.507059e+37
    %v951 = vand.u32 %v939, 2147483648
    %v952 = vor.u32 1.1754944e-38, %v951
    %v953 = vsel %vm950, %v952, %v948
    %v954 = vmul.f32 1.0, %v953
    %v955 = vtanh.pop %v915
    %v956 = vxor.u32 %v916, 2147483648
    %v957 = vmul.f32 %v956, 1.442695
    %v958 = vpow.pop %v957
    %v959 = vadd.f32 %v958, 1.0
    %v960 = vrcp.pop %v959
    %v961 = vmul.f32 %v959, %v960
    %v962 = vsub.f32 1.0, %v961
    %v963 = vmul.f32 %v960, %v962
    %v964 = vadd.f32 %v960, %v963
    %vm965 = vweird.f32 %v959
    %vm966 = vweird.f32 %v960
    %vm967 = vmor %vm965, %vm966
    %v968 = vsel %vm967, %v960, %v964
    %v969 = vand.u32 2147483647, %v959
    %vm970 = vcmp.eq.f32.partialorder %v969, 8.507059e+37
    %v971 = vand.u32 %v959, 2147483648
    %v972 = vor.u32 1.1754944e-38, %v971
    %v973 = vsel %vm970, %v972, %v968
    %v974 = vmul.f32 1.0, %v973
    %v975 = vmul.f32 %v954, %v825
    %v976 = vmul.f32 %v935, %v955
    %v977 = vadd.f32 %v975, %v976
    %v978 = vtanh.pop %v977
    %v979 = vmul.f32 %v974, %v978
    %s980 = scalar_lea.vmem [#allocation2], 160
    %v981 = vld [vmem:[%s980] sm:$0xff]
    %v982 = vld [vmem:[%s980 + $0x8] sm:$0xff]
    %v983 = vld [vmem:[%s980 + $0x10] sm:$0xff]
    %v984 = vld [vmem:[%s980 + $0x18] sm:$0xff]
    %985 = vmatpush.msra.mxu0 %v217
    %986 = vmatpush.msra.mxu0 %v213
    %987 = vmatpush.msra.mxu0 %v209
    %988 = vmatpush.msra.mxu0 %v205
    %989 = vmatpush.msra.mxu0 %v201
    %990 = vmatpush.msra.mxu0 %v197
    %991 = vmatpush.msra.mxu0 %v193
    %992 = vmatpush.msra.mxu0 %v189
    %993 = vmatpush.msra.mxu0 %v185
    %994 = vmatpush.msra.mxu0 %v181
    %995 = vmatpush.msra.mxu0 %v177
    %996 = vmatpush.msra.mxu0 %v173
    %997 = vmatpush.msra.mxu0 %v169
    %998 = vmatpush.msra.mxu0 %v165
    %999 = vmatpush.msra.mxu0 %v161
    %1000 = vmatpush.msra.mxu0 %v157
    %1001 = vmatmul.f32.gmra.mxu0 %v979
    %v1002 = vpop.f32.mrf.mxu0
    %v1003 = vadd.f32 0.0, %v1002
    %1004 = vdwg.mxu0
    %1005 = vmatpush.msra.mxu0 %v218
    %1006 = vmatpush.msra.mxu0 %v214
    %1007 = vmatpush.msra.mxu0 %v210
    %1008 = vmatpush.msra.mxu0 %v206
    %1009 = vmatpush.msra.mxu0 %v202
    %1010 = vmatpush.msra.mxu0 %v198
    %1011 = vmatpush.msra.mxu0 %v194
    %1012 = vmatpush.msra.mxu0 %v190
    %1013 = vmatpush.msra.mxu0 %v186
    %1014 = vmatpush.msra.mxu0 %v182
    %1015 = vmatpush.msra.mxu0 %v178
    %1016 = vmatpush.msra.mxu0 %v174
    %1017 = vmatpush.msra.mxu0 %v170
    %1018 = vmatpush.msra.mxu0 %v166
    %1019 = vmatpush.msra.mxu0 %v162
    %1020 = vmatpush.msra.mxu0 %v158
    %1021 = vmatmul.f32.gmra.mxu0 %v979
    %v1022 = vpop.f32.mrf.mxu0
    %v1023 = vadd.f32 0.0, %v1022
    %1024 = vdwg.mxu0
    %1025 = vmatpush.msra.mxu0 %v219
    %1026 = vmatpush.msra.mxu0 %v215
    %1027 = vmatpush.msra.mxu0 %v211
    %1028 = vmatpush.msra.mxu0 %v207
    %1029 = vmatpush.msra.mxu0 %v203
    %1030 = vmatpush.msra.mxu0 %v199
    %1031 = vmatpush.msra.mxu0 %v195
    %1032 = vmatpush.msra.mxu0 %v191
    %1033 = vmatpush.msra.mxu0 %v187
    %1034 = vmatpush.msra.mxu0 %v183
    %1035 = vmatpush.msra.mxu0 %v179
    %1036 = vmatpush.msra.mxu0 %v175
    %1037 = vmatpush.msra.mxu0 %v171
    %1038 = vmatpush.msra.mxu0 %v167
    %1039 = vmatpush.msra.mxu0 %v163
    %1040 = vmatpush.msra.mxu0 %v159
    %1041 = vmatmul.f32.gmra.mxu0 %v979
    %v1042 = vpop.f32.mrf.mxu0
    %v1043 = vadd.f32 0.0, %v1042
    %1044 = vdwg.mxu0
    %1045 = vmatpush.msra.mxu0 %v220
    %1046 = vmatpush.msra.mxu0 %v216
    %1047 = vmatpush.msra.mxu0 %v212
    %1048 = vmatpush.msra.mxu0 %v208
    %1049 = vmatpush.msra.mxu0 %v204
    %1050 = vmatpush.msra.mxu0 %v200
    %1051 = vmatpush.msra.mxu0 %v196
    %1052 = vmatpush.msra.mxu0 %v192
    %1053 = vmatpush.msra.mxu0 %v188
    %1054 = vmatpush.msra.mxu0 %v184
    %1055 = vmatpush.msra.mxu0 %v180
    %1056 = vmatpush.msra.mxu0 %v176
    %1057 = vmatpush.msra.mxu0 %v172
    %1058 = vmatpush.msra.mxu0 %v168
    %1059 = vmatpush.msra.mxu0 %v164
    %1060 = vmatpush.msra.mxu0 %v160
    %1061 = vmatmul.f32.gmra.mxu0 %v979
    %v1062 = vpop.f32.mrf.mxu0
    %v1063 = vadd.f32 0.0, %v1062
    %1064 = vdwg.mxu0
    %v1065 = vadd.f32 %v981, %v1003
    %v1066 = vadd.f32 %v982, %v1023
    %v1067 = vadd.f32 %v983, %v1043
    %v1068 = vadd.f32 %v984, %v1063
    %v1069 = vxor.u32 %v1065, 2147483648
    %v1070 = vmul.f32 %v1069, 1.442695
    %v1071 = vpow.pop %v1070
    %v1072 = vadd.f32 %v1071, 1.0
    %v1073 = vrcp.pop %v1072
    %v1074 = vmul.f32 %v1072, %v1073
    %v1075 = vsub.f32 1.0, %v1074
    %v1076 = vmul.f32 %v1073, %v1075
    %v1077 = vadd.f32 %v1073, %v1076
    %vm1078 = vweird.f32 %v1072
    %vm1079 = vweird.f32 %v1073
    %vm1080 = vmor %vm1078, %vm1079
    %v1081 = vsel %vm1080, %v1073, %v1077
    %v1082 = vand.u32 2147483647, %v1072
    %vm1083 = vcmp.eq.f32.partialorder %v1082, 8.507059e+37
    %v1084 = vand.u32 %v1072, 2147483648
    %v1085 = vor.u32 1.1754944e-38, %v1084
    %v1086 = vsel %vm1083, %v1085, %v1081
    %v1087 = vmul.f32 1.0, %v1086
    %v1088 = vxor.u32 %v1066, 2147483648
    %v1089 = vmul.f32 %v1088, 1.442695
    %v1090 = vpow.pop %v1089
    %v1091 = vadd.f32 %v1090, 1.0
    %v1092 = vrcp.pop %v1091
    %v1093 = vmul.f32 %v1091, %v1092
    %v1094 = vsub.f32 1.0, %v1093
    %v1095 = vmul.f32 %v1092, %v1094
    %v1096 = vadd.f32 %v1092, %v1095
    %vm1097 = vweird.f32 %v1091
    %vm1098 = vweird.f32 %v1092
    %vm1099 = vmor %vm1097, %vm1098
    %v1100 = vsel %vm1099, %v1092, %v1096
    %v1101 = vand.u32 2147483647, %v1091
    %vm1102 = vcmp.eq.f32.partialorder %v1101, 8.507059e+37
    %v1103 = vand.u32 %v1091, 2147483648
    %v1104 = vor.u32 1.1754944e-38, %v1103
    %v1105 = vsel %vm1102, %v1104, %v1100
    %v1106 = vmul.f32 1.0, %v1105
    %v1107 = vtanh.pop %v1067
    %v1108 = vxor.u32 %v1068, 2147483648
    %v1109 = vmul.f32 %v1108, 1.442695
    %v1110 = vpow.pop %v1109
    %v1111 = vadd.f32 %v1110, 1.0
    %v1112 = vrcp.pop %v1111
    %v1113 = vmul.f32 %v1111, %v1112
    %v1114 = vsub.f32 1.0, %v1113
    %v1115 = vmul.f32 %v1112, %v1114
    %v1116 = vadd.f32 %v1112, %v1115
    %vm1117 = vweird.f32 %v1111
    %vm1118 = vweird.f32 %v1112
    %vm1119 = vmor %vm1117, %vm1118
    %v1120 = vsel %vm1119, %v1112, %v1116
    %v1121 = vand.u32 2147483647, %v1111
    %vm1122 = vcmp.eq.f32.partialorder %v1121, 8.507059e+37
    %v1123 = vand.u32 %v1111, 2147483648
    %v1124 = vor.u32 1.1754944e-38, %v1123
    %v1125 = vsel %vm1122, %v1124, %v1120
    %v1126 = vmul.f32 1.0, %v1125
    %v1127 = vmul.f32 %v1106, %v977
    %v1128 = vmul.f32 %v1087, %v1107
    %v1129 = vadd.f32 %v1127, %v1128
    %v1130 = vtanh.pop %v1129
    %v1131 = vmul.f32 %v1126, %v1130
    %s1132 = scalar_lea.vmem [#allocation2], 192
    %v1133 = vld [vmem:[%s1132] sm:$0xff]
    %v1134 = vld [vmem:[%s1132 + $0x8] sm:$0xff]
    %v1135 = vld [vmem:[%s1132 + $0x10] sm:$0xff]
    %v1136 = vld [vmem:[%s1132 + $0x18] sm:$0xff]
    %1137 = vmatpush.msra.mxu0 %v217
    %1138 = vmatpush.msra.mxu0 %v213
    %1139 = vmatpush.msra.mxu0 %v209
    %1140 = vmatpush.msra.mxu0 %v205
    %1141 = vmatpush.msra.mxu0 %v201
    %1142 = vmatpush.msra.mxu0 %v197
    %1143 = vmatpush.msra.mxu0 %v193
    %1144 = vmatpush.msra.mxu0 %v189
    %1145 = vmatpush.msra.mxu0 %v185
    %1146 = vmatpush.msra.mxu0 %v181
    %1147 = vmatpush.msra.mxu0 %v177
    %1148 = vmatpush.msra.mxu0 %v173
    %1149 = vmatpush.msra.mxu0 %v169
    %1150 = vmatpush.msra.mxu0 %v165
    %1151 = vmatpush.msra.mxu0 %v161
    %1152 = vmatpush.msra.mxu0 %v157
    %1153 = vmatmul.f32.gmra.mxu0 %v1131
    %v1154 = vpop.f32.mrf.mxu0
    %v1155 = vadd.f32 0.0, %v1154
    %1156 = vdwg.mxu0
    %1157 = vmatpush.msra.mxu0 %v218
    %1158 = vmatpush.msra.mxu0 %v214
    %1159 = vmatpush.msra.mxu0 %v210
    %1160 = vmatpush.msra.mxu0 %v206
    %1161 = vmatpush.msra.mxu0 %v202
    %1162 = vmatpush.msra.mxu0 %v198
    %1163 = vmatpush.msra.mxu0 %v194
    %1164 = vmatpush.msra.mxu0 %v190
    %1165 = vmatpush.msra.mxu0 %v186
    %1166 = vmatpush.msra.mxu0 %v182
    %1167 = vmatpush.msra.mxu0 %v178
    %1168 = vmatpush.msra.mxu0 %v174
    %1169 = vmatpush.msra.mxu0 %v170
    %1170 = vmatpush.msra.mxu0 %v166
    %1171 = vmatpush.msra.mxu0 %v162
    %1172 = vmatpush.msra.mxu0 %v158
    %1173 = vmatmul.f32.gmra.mxu0 %v1131
    %v1174 = vpop.f32.mrf.mxu0
    %v1175 = vadd.f32 0.0, %v1174
    %1176 = vdwg.mxu0
    %1177 = vmatpush.msra.mxu0 %v219
    %1178 = vmatpush.msra.mxu0 %v215
    %1179 = vmatpush.msra.mxu0 %v211
    %1180 = vmatpush.msra.mxu0 %v207
    %1181 = vmatpush.msra.mxu0 %v203
    %1182 = vmatpush.msra.mxu0 %v199
    %1183 = vmatpush.msra.mxu0 %v195
    %1184 = vmatpush.msra.mxu0 %v191
    %1185 = vmatpush.msra.mxu0 %v187
    %1186 = vmatpush.msra.mxu0 %v183
    %1187 = vmatpush.msra.mxu0 %v179
    %1188 = vmatpush.msra.mxu0 %v175
    %1189 = vmatpush.msra.mxu0 %v171
    %1190 = vmatpush.msra.mxu0 %v167
    %1191 = vmatpush.msra.mxu0 %v163
    %1192 = vmatpush.msra.mxu0 %v159
    %1193 = vmatmul.f32.gmra.mxu0 %v1131
    %v1194 = vpop.f32.mrf.mxu0
    %v1195 = vadd.f32 0.0, %v1194
    %1196 = vdwg.mxu0
    %1197 = vmatpush.msra.mxu0 %v220
    %1198 = vmatpush.msra.mxu0 %v216
    %1199 = vmatpush.msra.mxu0 %v212
    %1200 = vmatpush.msra.mxu0 %v208
    %1201 = vmatpush.msra.mxu0 %v204
    %1202 = vmatpush.msra.mxu0 %v200
    %1203 = vmatpush.msra.mxu0 %v196
    %1204 = vmatpush.msra.mxu0 %v192
    %1205 = vmatpush.msra.mxu0 %v188
    %1206 = vmatpush.msra.mxu0 %v184
    %1207 = vmatpush.msra.mxu0 %v180
    %1208 = vmatpush.msra.mxu0 %v176
    %1209 = vmatpush.msra.mxu0 %v172
    %1210 = vmatpush.msra.mxu0 %v168
    %1211 = vmatpush.msra.mxu0 %v164
    %1212 = vmatpush.msra.mxu0 %v160
    %1213 = vmatmul.f32.gmra.mxu0 %v1131
    %v1214 = vpop.f32.mrf.mxu0
    %v1215 = vadd.f32 0.0, %v1214
    %1216 = vdwg.mxu0
    %v1217 = vadd.f32 %v1133, %v1155
    %v1218 = vadd.f32 %v1134, %v1175
    %v1219 = vadd.f32 %v1135, %v1195
    %v1220 = vadd.f32 %v1136, %v1215
    %v1221 = vxor.u32 %v1217, 2147483648
    %v1222 = vmul.f32 %v1221, 1.442695
    %v1223 = vpow.pop %v1222
    %v1224 = vadd.f32 %v1223, 1.0
    %v1225 = vrcp.pop %v1224
    %v1226 = vmul.f32 %v1224, %v1225
    %v1227 = vsub.f32 1.0, %v1226
    %v1228 = vmul.f32 %v1225, %v1227
    %v1229 = vadd.f32 %v1225, %v1228
    %vm1230 = vweird.f32 %v1224
    %vm1231 = vweird.f32 %v1225
    %vm1232 = vmor %vm1230, %vm1231
    %v1233 = vsel %vm1232, %v1225, %v1229
    %v1234 = vand.u32 2147483647, %v1224
    %vm1235 = vcmp.eq.f32.partialorder %v1234, 8.507059e+37
    %v1236 = vand.u32 %v1224, 2147483648
    %v1237 = vor.u32 1.1754944e-38, %v1236
    %v1238 = vsel %vm1235, %v1237, %v1233
    %v1239 = vmul.f32 1.0, %v1238
    %v1240 = vxor.u32 %v1218, 2147483648
    %v1241 = vmul.f32 %v1240, 1.442695
    %v1242 = vpow.pop %v1241
    %v1243 = vadd.f32 %v1242, 1.0
    %v1244 = vrcp.pop %v1243
    %v1245 = vmul.f32 %v1243, %v1244
    %v1246 = vsub.f32 1.0, %v1245
    %v1247 = vmul.f32 %v1244, %v1246
    %v1248 = vadd.f32 %v1244, %v1247
    %vm1249 = vweird.f32 %v1243
    %vm1250 = vweird.f32 %v1244
    %vm1251 = vmor %vm1249, %vm1250
    %v1252 = vsel %vm1251, %v1244, %v1248
    %v1253 = vand.u32 2147483647, %v1243
    %vm1254 = vcmp.eq.f32.partialorder %v1253, 8.507059e+37
    %v1255 = vand.u32 %v1243, 2147483648
    %v1256 = vor.u32 1.1754944e-38, %v1255
    %v1257 = vsel %vm1254, %v1256, %v1252
    %v1258 = vmul.f32 1.0, %v1257
    %v1259 = vtanh.pop %v1219
    %v1260 = vxor.u32 %v1220, 2147483648
    %v1261 = vmul.f32 %v1260, 1.442695
    %v1262 = vpow.pop %v1261
    %v1263 = vadd.f32 %v1262, 1.0
    %v1264 = vrcp.pop %v1263
    %v1265 = vmul.f32 %v1263, %v1264
    %v1266 = vsub.f32 1.0, %v1265
    %v1267 = vmul.f32 %v1264, %v1266
    %v1268 = vadd.f32 %v1264, %v1267
    %vm1269 = vweird.f32 %v1263
    %vm1270 = vweird.f32 %v1264
    %vm1271 = vmor %vm1269, %vm1270
    %v1272 = vsel %vm1271, %v1264, %v1268
    %v1273 = vand.u32 2147483647, %v1263
    %vm1274 = vcmp.eq.f32.partialorder %v1273, 8.507059e+37
    %v1275 = vand.u32 %v1263, 2147483648
    %v1276 = vor.u32 1.1754944e-38, %v1275
    %v1277 = vsel %vm1274, %v1276, %v1272
    %v1278 = vmul.f32 1.0, %v1277
    %v1279 = vmul.f32 %v1258, %v1129
    %v1280 = vmul.f32 %v1239, %v1259
    %v1281 = vadd.f32 %v1279, %v1280
    %v1282 = vtanh.pop %v1281
    %v1283 = vmul.f32 %v1278, %v1282
    %s1284 = scalar_lea.vmem [#allocation2], 224
    %v1285 = vld [vmem:[%s1284] sm:$0xff]
    %v1286 = vld [vmem:[%s1284 + $0x8] sm:$0xff]
    %v1287 = vld [vmem:[%s1284 + $0x10] sm:$0xff]
    %v1288 = vld [vmem:[%s1284 + $0x18] sm:$0xff]
    %1289 = vmatpush.msra.mxu0 %v217
    %1290 = vmatpush.msra.mxu0 %v213
    %1291 = vmatpush.msra.mxu0 %v209
    %1292 = vmatpush.msra.mxu0 %v205
    %1293 = vmatpush.msra.mxu0 %v201
    %1294 = vmatpush.msra.mxu0 %v197
    %1295 = vmatpush.msra.mxu0 %v193
    %1296 = vmatpush.msra.mxu0 %v189
    %1297 = vmatpush.msra.mxu0 %v185
    %1298 = vmatpush.msra.mxu0 %v181
    %1299 = vmatpush.msra.mxu0 %v177
    %1300 = vmatpush.msra.mxu0 %v173
    %1301 = vmatpush.msra.mxu0 %v169
    %1302 = vmatpush.msra.mxu0 %v165
    %1303 = vmatpush.msra.mxu0 %v161
    %1304 = vmatpush.msra.mxu0 %v157
    %1305 = vmatmul.f32.gmra.mxu0 %v1283
    %v1306 = vpop.f32.mrf.mxu0
    %v1307 = vadd.f32 0.0, %v1306
    %1308 = vdwg.mxu0
    %1309 = vmatpush.msra.mxu0 %v218
    %1310 = vmatpush.msra.mxu0 %v214
    %1311 = vmatpush.msra.mxu0 %v210
    %1312 = vmatpush.msra.mxu0 %v206
    %1313 = vmatpush.msra.mxu0 %v202
    %1314 = vmatpush.msra.mxu0 %v198
    %1315 = vmatpush.msra.mxu0 %v194
    %1316 = vmatpush.msra.mxu0 %v190
    %1317 = vmatpush.msra.mxu0 %v186
    %1318 = vmatpush.msra.mxu0 %v182
    %1319 = vmatpush.msra.mxu0 %v178
    %1320 = vmatpush.msra.mxu0 %v174
    %1321 = vmatpush.msra.mxu0 %v170
    %1322 = vmatpush.msra.mxu0 %v166
    %1323 = vmatpush.msra.mxu0 %v162
    %1324 = vmatpush.msra.mxu0 %v158
    %1325 = vmatmul.f32.gmra.mxu0 %v1283
    %v1326 = vpop.f32.mrf.mxu0
    %v1327 = vadd.f32 0.0, %v1326
    %1328 = vdwg.mxu0
    %1329 = vmatpush.msra.mxu0 %v219
    %1330 = vmatpush.msra.mxu0 %v215
    %1331 = vmatpush.msra.mxu0 %v211
    %1332 = vmatpush.msra.mxu0 %v207
    %1333 = vmatpush.msra.mxu0 %v203
    %1334 = vmatpush.msra.mxu0 %v199
    %1335 = vmatpush.msra.mxu0 %v195
    %1336 = vmatpush.msra.mxu0 %v191
    %1337 = vmatpush.msra.mxu0 %v187
    %1338 = vmatpush.msra.mxu0 %v183
    %1339 = vmatpush.msra.mxu0 %v179
    %1340 = vmatpush.msra.mxu0 %v175
    %1341 = vmatpush.msra.mxu0 %v171
    %1342 = vmatpush.msra.mxu0 %v167
    %1343 = vmatpush.msra.mxu0 %v163
    %1344 = vmatpush.msra.mxu0 %v159
    %1345 = vmatmul.f32.gmra.mxu0 %v1283
    %v1346 = vpop.f32.mrf.mxu0
    %v1347 = vadd.f32 0.0, %v1346
    %1348 = vdwg.mxu0
    %1349 = vmatpush.msra.mxu0 %v220
    %1350 = vmatpush.msra.mxu0 %v216
    %1351 = vmatpush.msra.mxu0 %v212
    %1352 = vmatpush.msra.mxu0 %v208
    %1353 = vmatpush.msra.mxu0 %v204
    %1354 = vmatpush.msra.mxu0 %v200
    %1355 = vmatpush.msra.mxu0 %v196
    %1356 = vmatpush.msra.mxu0 %v192
    %1357 = vmatpush.msra.mxu0 %v188
    %1358 = vmatpush.msra.mxu0 %v184
    %1359 = vmatpush.msra.mxu0 %v180
    %1360 = vmatpush.msra.mxu0 %v176
    %1361 = vmatpush.msra.mxu0 %v172
    %1362 = vmatpush.msra.mxu0 %v168
    %1363 = vmatpush.msra.mxu0 %v164
    %1364 = vmatpush.msra.mxu0 %v160
    %1365 = vmatmul.f32.gmra.mxu0 %v1283
    %v1366 = vpop.f32.mrf.mxu0
    %v1367 = vadd.f32 0.0, %v1366
    %1368 = vdwg.mxu0
    %v1369 = vadd.f32 %v1285, %v1307
    %v1370 = vadd.f32 %v1286, %v1327
    %v1371 = vadd.f32 %v1287, %v1347
    %v1372 = vadd.f32 %v1288, %v1367
    %v1373 = vxor.u32 %v1369, 2147483648
    %v1374 = vmul.f32 %v1373, 1.442695
    %v1375 = vpow.pop %v1374
    %v1376 = vadd.f32 %v1375, 1.0
    %v1377 = vrcp.pop %v1376
    %v1378 = vmul.f32 %v1376, %v1377
    %v1379 = vsub.f32 1.0, %v1378
    %v1380 = vmul.f32 %v1377, %v1379
    %v1381 = vadd.f32 %v1377, %v1380
    %vm1382 = vweird.f32 %v1376
    %vm1383 = vweird.f32 %v1377
    %vm1384 = vmor %vm1382, %vm1383
    %v1385 = vsel %vm1384, %v1377, %v1381
    %v1386 = vand.u32 2147483647, %v1376
    %vm1387 = vcmp.eq.f32.partialorder %v1386, 8.507059e+37
    %v1388 = vand.u32 %v1376, 2147483648
    %v1389 = vor.u32 1.1754944e-38, %v1388
    %v1390 = vsel %vm1387, %v1389, %v1385
    %v1391 = vmul.f32 1.0, %v1390
    %v1392 = vxor.u32 %v1370, 2147483648
    %v1393 = vmul.f32 %v1392, 1.442695
    %v1394 = vpow.pop %v1393
    %v1395 = vadd.f32 %v1394, 1.0
    %v1396 = vrcp.pop %v1395
    %v1397 = vmul.f32 %v1395, %v1396
    %v1398 = vsub.f32 1.0, %v1397
    %v1399 = vmul.f32 %v1396, %v1398
    %v1400 = vadd.f32 %v1396, %v1399
    %vm1401 = vweird.f32 %v1395
    %vm1402 = vweird.f32 %v1396
    %vm1403 = vmor %vm1401, %vm1402
    %v1404 = vsel %vm1403, %v1396, %v1400
    %v1405 = vand.u32 2147483647, %v1395
    %vm1406 = vcmp.eq.f32.partialorder %v1405, 8.507059e+37
    %v1407 = vand.u32 %v1395, 2147483648
    %v1408 = vor.u32 1.1754944e-38, %v1407
    %v1409 = vsel %vm1406, %v1408, %v1404
    %v1410 = vmul.f32 1.0, %v1409
    %v1411 = vtanh.pop %v1371
    %v1412 = vxor.u32 %v1372, 2147483648
    %v1413 = vmul.f32 %v1412, 1.442695
    %v1414 = vpow.pop %v1413
    %v1415 = vadd.f32 %v1414, 1.0
    %v1416 = vrcp.pop %v1415
    %v1417 = vmul.f32 %v1415, %v1416
    %v1418 = vsub.f32 1.0, %v1417
    %v1419 = vmul.f32 %v1416, %v1418
    %v1420 = vadd.f32 %v1416, %v1419
    %vm1421 = vweird.f32 %v1415
    %vm1422 = vweird.f32 %v1416
    %vm1423 = vmor %vm1421, %vm1422
    %v1424 = vsel %vm1423, %v1416, %v1420
    %v1425 = vand.u32 2147483647, %v1415
    %vm1426 = vcmp.eq.f32.partialorder %v1425, 8.507059e+37
    %v1427 = vand.u32 %v1415, 2147483648
    %v1428 = vor.u32 1.1754944e-38, %v1427
    %v1429 = vsel %vm1426, %v1428, %v1424
    %v1430 = vmul.f32 1.0, %v1429
    %v1431 = vmul.f32 %v1410, %v1281
    %v1432 = vmul.f32 %v1391, %v1411
    %v1433 = vadd.f32 %v1431, %v1432
    %v1434 = vtanh.pop %v1433
    %v1435 = vmul.f32 %v1430, %v1434
    %v1436 = vld [vmem:[#allocation7] sm:$0xff]
    %v1437 = vld [vmem:[#allocation7 + $0x8] sm:$0xff]
    %v1438 = vld [vmem:[#allocation7 + $0x10] sm:$0xff]
    %v1439 = vld [vmem:[#allocation7 + $0x18] sm:$0xff]
    %v1440 = vld [vmem:[#allocation7 + $0x20] sm:$0xff]
    %v1441 = vld [vmem:[#allocation7 + $0x28] sm:$0xff]
    %v1442 = vld [vmem:[#allocation7 + $0x30] sm:$0xff]
    %v1443 = vld [vmem:[#allocation7 + $0x38] sm:$0xff]
    %v1444 = vld [vmem:[#allocation7 + $0x40] sm:$0xff]
    %v1445 = vld [vmem:[#allocation7 + $0x48] sm:$0xff]
    %v1446 = vld [vmem:[#allocation7 + $0x50] sm:$0xff]
    %v1447 = vld [vmem:[#allocation7 + $0x58] sm:$0xff]
    %v1448 = vld [vmem:[#allocation7 + $0x60] sm:$0xff]
    %v1449 = vld [vmem:[#allocation7 + $0x68] sm:$0xff]
    %v1450 = vld [vmem:[#allocation7 + $0x70] sm:$0xff]
    %v1451 = vld [vmem:[#allocation7 + $0x78] sm:$0xff]
    %1452 = vmatpush.msra.mxu0 %v1451
    %1453 = vmatpush.msra.mxu0 %v1450
    %1454 = vmatpush.msra.mxu0 %v1449
    %1455 = vmatpush.msra.mxu0 %v1448
    %1456 = vmatpush.msra.mxu0 %v1447
    %1457 = vmatpush.msra.mxu0 %v1446
    %1458 = vmatpush.msra.mxu0 %v1445
    %1459 = vmatpush.msra.mxu0 %v1444
    %1460 = vmatpush.msra.mxu0 %v1443
    %1461 = vmatpush.msra.mxu0 %v1442
    %1462 = vmatpush.msra.mxu0 %v1441
    %1463 = vmatpush.msra.mxu0 %v1440
    %1464 = vmatpush.msra.mxu0 %v1439
    %1465 = vmatpush.msra.mxu0 %v1438
    %1466 = vmatpush.msra.mxu0 %v1437
    %1467 = vmatpush.msra.mxu0 %v1436
    %1468 = vmatmul.f32.gmra.mxu0 %v1435
    %v1469 = vpop.f32.mrf.mxu0
    %v1470 = vadd.f32 %v155, %v1469
    %1471 = vdwg.mxu0
    %v1472 = vmax.f32 %v1470, 0.0
    %v1473 = vld [vmem:[%s7] sm:$0xff]
    %v1474 = vld [vmem:[%s7 + $0x8] sm:$0xff]
    %v1475 = vld [vmem:[%s7 + $0x10] sm:$0xff]
    %v1476 = vld [vmem:[%s7 + $0x18] sm:$0xff]
    %v1477 = vld [vmem:[%s7 + $0x20] sm:$0xff]
    %v1478 = vld [vmem:[%s7 + $0x28] sm:$0xff]
    %v1479 = vld [vmem:[%s7 + $0x30] sm:$0xff]
    %v1480 = vld [vmem:[%s7 + $0x38] sm:$0xff]
    %v1481 = vld [vmem:[%s7 + $0x40] sm:$0xff]
    %v1482 = vld [vmem:[%s7 + $0x48] sm:$0xff]
    %v1483 = vld [vmem:[%s7 + $0x50] sm:$0xff]
    %v1484 = vld [vmem:[%s7 + $0x58] sm:$0xff]
    %v1485 = vld [vmem:[%s7 + $0x60] sm:$0xff]
    %v1486 = vld [vmem:[%s7 + $0x68] sm:$0xff]
    %v1487 = vld [vmem:[%s7 + $0x70] sm:$0xff]
    %v1488 = vld [vmem:[%s7 + $0x78] sm:$0xff]
    %v1489 = vld [vmem:[%s8] sm:$0x1]
    %v1491 = vperm.slane %v1489, 0
    %1493 = vmatpush.msra.mxu0 %v1488
    %1494 = vmatpush.msra.mxu0 %v1487
    %1495 = vmatpush.msra.mxu0 %v1486
    %1496 = vmatpush.msra.mxu0 %v1485
    %1497 = vmatpush.msra.mxu0 %v1484
    %1498 = vmatpush.msra.mxu0 %v1483
    %1499 = vmatpush.msra.mxu0 %v1482
    %1500 = vmatpush.msra.mxu0 %v1481
    %1501 = vmatpush.msra.mxu0 %v1480
    %1502 = vmatpush.msra.mxu0 %v1479
    %1503 = vmatpush.msra.mxu0 %v1478
    %1504 = vmatpush.msra.mxu0 %v1477
    %1505 = vmatpush.msra.mxu0 %v1476
    %1506 = vmatpush.msra.mxu0 %v1475
    %1507 = vmatpush.msra.mxu0 %v1474
    %1508 = vmatpush.msra.mxu0 %v1473
    %1509 = vmatmul.f32.gmra.mxu0 %v1472
    %v1510 = vpop.f32.mrf.mxu0
    %v1511 = vadd.f32 %v1491, %v1510
    %1512 = vdwg.mxu0
    %vm1513 = vcmask 80896
    %1514 = vst.msk [vmem:[#allocation8] sm:$0xff] %vm1513, %v1511
    // Predicated region
    $region50: #{tpu_custom_call.1} parent=1 // pred_check
      _
    $region51: #{tpu_custom_call.1} parent=1 // pred_check_branch
      %1516 = sbr.rel (0) target = $region53
    $region52: #{tpu_custom_call.1} parent=1 // pred_region
      %1518 = vsyncadd [#allocation4], 0
      %s1520 = sshll.u32 [#allocation8], 4
      %s1521 = int_to_ptr.vmem [resolvable:$true] %s1520
      %s1522 = sshll.u32 %s9, 4
      %s1523 = int_to_ptr.hbm [resolvable:$true] %s1522
      %1525 = dma.vmem_to_hbm [thread:$0]  %s1521, 128, %s1523, [#allocation4]
    $region53: #{tpu_custom_call.1} parent=1 // pred_fallthru
      _
    // Predicated region
    $region54: #{tpu_custom_call.1} parent=1 // pred_check
      _
    $region55: #{tpu_custom_call.1} parent=1 // pred_check_branch
      %1527 = sbr.rel (0) target = $region57
    $region56: #{tpu_custom_call.1} parent=1 // pred_region
      %1529 = dma.done [#allocation4], 128
    $region57: #{tpu_custom_call.1} parent=1 // pred_fallthru
      _
    %1530 = vsyncpa [#allocation3], 1
    %1531 = vsyncpa [#allocation6], 1
    %1532 = vsyncpa [#allocation4], 1

</llo_original>
